<compile_context>
chip_gen: v7x
topology: tpu7x:2x2x1
jax: 0.10.0
libtpu: 0.0.40
codegen_flags: <defaults>
</compile_context>

<pallas_src>
import functools
import math

import jax
import jax.numpy as jnp
from jax.experimental import pallas as pl
from jax.experimental.pallas import tpu as pltpu


# ------------------------------ helpers -------------------------------------

def _vmem_capacity_bytes():
    """Physical VMEM per TensorCore; conservative fallback if query fails."""
    try:
        return int(pltpu.get_tpu_info().vmem_capacity_bytes)
    except Exception:
        return 64 * 1024 * 1024   # v7x per-core VMEM (smallest across gens)


def _largest_tile(total, target):
    """Largest multiple of 128 that divides `total` and is <= target.
    Falls back to `total` (full extent is always a legal block dim)."""
    t = min(target, total)
    t = (t // 128) * 128
    while t >= 128:
        if total % t == 0:
            return t
        t -= 128
    return total


def _bytes_proj(c, bs):
    """Rough VMEM working set of the projection kernel (double-buffered)."""
    x_blk = c * bs * 4
    outs = 3 * bs * c * 2
    weights = 3 * c * c * 2 + 3 * c * 4
    interm = bs * c * 2 + 3 * bs * c * 4   # bf16 transpose + three f32 results
    return 2 * (x_blk + outs + weights) + interm


def _bytes_attn_kvres(c, s_len, bq):
    """Working set of the whole-KV-resident attention kernel."""
    io = bq * c * 2 + 2 * (c * s_len * 2) + c * bq * 4 + c * bq * 4
    weights = c * c * 2 + c * 4
    interm = 2 * bq * s_len * 4 + 3 * bq * c * 4   # scores/p + o_n/o_seq/o_c
    return 2 * (io + weights) + interm


def _bytes_attn_flash(c, s_len, bq, bk):
    """Working set of the flash (online-softmax) attention kernel."""
    del s_len
    io = bq * c * 2 + c * bk * 2 + bk * c * 2 + c * bq * 4 + c * bq * 4
    weights = c * c * 2 + c * 4
    scratch = bq * (c + 2) * 4
    interm = 2 * bq * bk * 4 + 3 * bq * c * 4
    return 2 * (io + weights) + scratch + interm


def _derive_vmem_limit(estimate, hard_cap):
    return int(min(hard_cap, max(48 * 1024 * 1024, (estimate * 3) // 2)))


# ------------------------------ kernel 1 -------------------------------------

def _proj_kernel(x_ref, wq_ref, wk_ref, wv_ref, bq_ref, bk_ref, bv_ref,
                 q_ref, k_ref, v_ref, *, scale):
    """Fused qkv projection. x block is channel-major (C, ts)."""
    xb16 = x_ref[0].astype(jnp.bfloat16)       # (C, ts) bf16 (cast BEFORE transpose)
    xn16 = xb16.T                               # (ts, C) bf16, one packed XLU transpose

    # q (seq-major); 1/sqrt(C) folded in here once instead of scaling SxS scores.
    q = jnp.dot(xn16, wq_ref[...], preferred_element_type=jnp.float32)
    q = (q + bq_ref[...]) * scale               # (ts, C)
    # k stays channel-major so scores = q @ k is a standard matmul (no k^T).
    k = jnp.dot(wk_ref[...], xb16, preferred_element_type=jnp.float32)
    k = k + bk_ref[...]                         # (C, ts)
    # v (seq-major) so acc += p @ v is a standard matmul.
    v = jnp.dot(xn16, wv_ref[...], preferred_element_type=jnp.float32)
    v = v + bv_ref[...]                         # (ts, C)

    q_ref[0] = q.astype(q_ref.dtype)
    k_ref[0] = k.astype(k_ref.dtype)
    v_ref[0] = v.astype(v_ref.dtype)


# ------------------------------ kernel 2 -------------------------------------

def _finalize_out(o_n_f32, wout_ref, bout_ref, xres_ref, o_ref):
    """out_proj (+bias) + residual, stored channel-major.
    wout_ref holds W_out^T, so o_n @ wout == o_n @ W_out^T (PyTorch Linear)."""
    o_seq = jnp.dot(o_n_f32.astype(jnp.bfloat16), wout_ref[...],
                    preferred_element_type=jnp.float32)          # (tq, C)
    o_c = o_seq.astype(jnp.bfloat16).T.astype(jnp.float32)       # (C, tq), bf16 transpose
    o_ref[0] = (o_c + bout_ref[...] + xres_ref[0]).astype(o_ref.dtype)


def _attn_kvres_kernel(q_ref, k_ref, v_ref, xres_ref, wout_ref, bout_ref, o_ref):
    """Whole-KV-resident attention: plain softmax over a (tq, S) score row."""
    q = q_ref[0]                                                  # (tq, C) bf16, pre-scaled
    k = k_ref[0]                                                  # (C, S) bf16
    v = v_ref[0]                                                  # (S, C) bf16

    s = jnp.dot(q, k, preferred_element_type=jnp.float32)        # (tq, S) f32
    m = jnp.max(s, axis=-1, keepdims=True)
    p = jnp.exp(s - m)
    denom = jnp.sum(p, axis=-1, keepdims=True)
    p = p * pl.reciprocal(denom, approx=True)                     # EUP slot, ~free
    o_n = jnp.dot(p.astype(jnp.bfloat16), v,
                  preferred_element_type=jnp.float32)             # (tq, C) f32
    _finalize_out(o_n, wout_ref, bout_ref, xres_ref, o_ref)


def _attn_flash_kernel(q_ref, k_ref, v_ref, xres_ref, wout_ref, bout_ref,
                       o_ref, m_sc, l_sc, acc_sc):
    """Flash attention (online softmax) + out_proj + residual."""
    ki = pl.program_id(2)

    @pl.when(ki == 0)
    def _():
        m_sc[...] = jnp.full(m_sc.shape, -jnp.inf, dtype=m_sc.dtype)
        l_sc[...] = jnp.zeros_like(l_sc)
        acc_sc[...] = jnp.zeros_like(acc_sc)

    q = q_ref[0]                                                  # (tq, C) bf16, pre-scaled
    k = k_ref[0]                                                  # (C, tk) bf16
    v = v_ref[0]                                                  # (tk, C) bf16

    s = jnp.dot(q, k, preferred_element_type=jnp.float32)        # (tq, tk) f32

    m_prev = m_sc[...]
    m_new = jnp.maximum(m_prev, jnp.max(s, axis=-1, keepdims=True))
    alpha = jnp.exp(m_prev - m_new)
    p = jnp.exp(s - m_new)
    l_sc[...] = alpha * l_sc[...] + jnp.sum(p, axis=-1, keepdims=True)
    acc_sc[...] = alpha * acc_sc[...] + jnp.dot(
        p.astype(jnp.bfloat16), v, preferred_element_type=jnp.float32)
    m_sc[...] = m_new

    @pl.when(ki == pl.num_programs(2) - 1)
    def _():
        o_n = acc_sc[...] * pl.reciprocal(l_sc[...], approx=True)
        _finalize_out(o_n, wout_ref, bout_ref, xres_ref, o_ref)


# ------------------------------ wrapper --------------------------------------

def vae_attention_block(x_nchw, w_in, b_in, w_out, b_out, *,
                        block_seq=None, block_q=None, block_k=None,
                        force_flash=False):
    """x_nchw: (N, C, H, W) f32. PyTorch parameter shapes:
    w_in (3C, C), b_in (3C,), w_out (C, C), b_out (C,)."""
    n, c, h, w = x_nchw.shape
    s = h * w
    x_ncs = x_nchw.reshape(n, c, s).astype(jnp.float32)   # free reshape, no transpose

    cap = _vmem_capacity_bytes()
    budget = (cap * 7) // 10     # strategy-selection budget (leave pipeline headroom)
    hard_cap = (cap * 7) // 8    # never request more scoped VMEM than this

    # Host-side weight prep: split in_proj into three (C, C) matrices (avoids
    # sub-128-lane slicing in-kernel) and pre-cast matmul weights to bf16.
    wq_t = jnp.transpose(w_in[0 * c:1 * c, :]).astype(jnp.bfloat16)   # (C, C)
    wk = w_in[1 * c:2 * c, :].astype(jnp.bfloat16)                    # (C, C)
    wv_t = jnp.transpose(w_in[2 * c:3 * c, :]).astype(jnp.bfloat16)   # (C, C)
    bq = b_in[0 * c:1 * c].reshape(1, c).astype(jnp.float32)
    bk = b_in[1 * c:2 * c].reshape(c, 1).astype(jnp.float32)
    bv = b_in[2 * c:3 * c].reshape(1, c).astype(jnp.float32)
    wo_t = jnp.transpose(w_out).astype(jnp.bfloat16)                  # (C, C) = W_out^T
    bo = b_out.reshape(c, 1).astype(jnp.float32)

    scale = 1.0 / math.sqrt(c)

    # ---- kernel 1: fused qkv projection ----
    bs_tile = _largest_tile(s, block_seq or 512)
    vmem1 = _derive_vmem_limit(_bytes_proj(c, bs_tile), hard_cap)

    q, k, v = pl.pallas_call(
        functools.partial(_proj_kernel, scale=scale),
        out_shape=(
            jax.ShapeDtypeStruct((n, s, c), jnp.bfloat16),   # q (seq-major)
            jax.ShapeDtypeStruct((n, c, s), jnp.bfloat16),   # k (channel-major)
            jax.ShapeDtypeStruct((n, s, c), jnp.bfloat16),   # v (seq-major)
        ),
        grid=(n, s // bs_tile),
        in_specs=[
            pl.BlockSpec((1, c, bs_tile), lambda b, i: (b, 0, i)),     # x
            pl.BlockSpec((c, c), lambda b, i: (0, 0)),                 # Wq^T
            pl.BlockSpec((c, c), lambda b, i: (0, 0)),                 # Wk
            pl.BlockSpec((c, c), lambda b, i: (0, 0)),                 # Wv^T
            pl.BlockSpec((1, c), lambda b, i: (0, 0)),                 # bq
            pl.BlockSpec((c, 1), lambda b, i: (0, 0)),                 # bk
            pl.BlockSpec((1, c), lambda b, i: (0, 0)),                 # bv
        ],
        out_specs=(
            pl.BlockSpec((1, bs_tile, c), lambda b, i: (b, i, 0)),
            pl.BlockSpec((1, c, bs_tile), lambda b, i: (b, 0, i)),
            pl.BlockSpec((1, bs_tile, c), lambda b, i: (b, i, 0)),
        ),
        compiler_params=pltpu.CompilerParams(
            dimension_semantics=("parallel", "parallel"),
            vmem_limit_bytes=vmem1),
    )(x_ncs, wq_t, wk, wv_t, bq, bk, bv)

    # ---- kernel 2: attention + out_proj + residual ----
    bq_tile = _largest_tile(s, block_q or 512)
    use_kvres = (not force_flash) and (_bytes_attn_kvres(c, s, bq_tile) <= budget)

    if use_kvres:
        # Whole K/V resident in VMEM: no kv grid axis, no online-softmax
        # bookkeeping (drops all alpha-rescale VPU work and K/V re-DMA).
        vmem2 = _derive_vmem_limit(_bytes_attn_kvres(c, s, bq_tile), hard_cap)
        out_ncs = pl.pallas_call(
            _attn_kvres_kernel,
            out_shape=jax.ShapeDtypeStruct((n, c, s), x_nchw.dtype),
            grid=(n, s // bq_tile),
            in_specs=[
                pl.BlockSpec((1, bq_tile, c), lambda b, qi: (b, qi, 0)),   # q
                pl.BlockSpec((1, c, s), lambda b, qi: (b, 0, 0)),          # k (resident)
                pl.BlockSpec((1, s, c), lambda b, qi: (b, 0, 0)),          # v (resident)
                pl.BlockSpec((1, c, bq_tile), lambda b, qi: (b, 0, qi)),   # residual x
                pl.BlockSpec((c, c), lambda b, qi: (0, 0)),                # W_out^T
                pl.BlockSpec((c, 1), lambda b, qi: (0, 0)),                # b_out
            ],
            out_specs=pl.BlockSpec((1, c, bq_tile), lambda b, qi: (b, 0, qi)),
            compiler_params=pltpu.CompilerParams(
                dimension_semantics=("parallel", "parallel"),
                vmem_limit_bytes=vmem2),
        )(q, k, v, x_ncs, wo_t, bo)
    else:
        # Flash variant for long sequences / small VMEM (v7x): auto-shrink
        # tiles (multiples of 128) until the working set fits the budget.
        bk_tile = _largest_tile(s, block_k or 1024)
        while (bk_tile > 128 and bk_tile % 256 == 0
               and _bytes_attn_flash(c, s, bq_tile, bk_tile) > budget):
            bk_tile //= 2
        while (bq_tile > 128 and bq_tile % 256 == 0
               and _bytes_attn_flash(c, s, bq_tile, bk_tile) > budget):
            bq_tile //= 2
        vmem2 = _derive_vmem_limit(_bytes_attn_flash(c, s, bq_tile, bk_tile),
                                   hard_cap)
        out_ncs = pl.pallas_call(
            _attn_flash_kernel,
            out_shape=jax.ShapeDtypeStruct((n, c, s), x_nchw.dtype),
            grid=(n, s // bq_tile, s // bk_tile),
            in_specs=[
                pl.BlockSpec((1, bq_tile, c), lambda b, qi, ki: (b, qi, 0)),   # q
                pl.BlockSpec((1, c, bk_tile), lambda b, qi, ki: (b, 0, ki)),   # k
                pl.BlockSpec((1, bk_tile, c), lambda b, qi, ki: (b, ki, 0)),   # v
                pl.BlockSpec((1, c, bq_tile), lambda b, qi, ki: (b, 0, qi)),   # residual x
                pl.BlockSpec((c, c), lambda b, qi, ki: (0, 0)),                # W_out^T
                pl.BlockSpec((c, 1), lambda b, qi, ki: (0, 0)),                # b_out
            ],
            out_specs=pl.BlockSpec((1, c, bq_tile), lambda b, qi, ki: (b, 0, qi)),
            scratch_shapes=[
                pltpu.VMEM((bq_tile, 1), jnp.float32),   # running max m
                pltpu.VMEM((bq_tile, 1), jnp.float32),   # running denom l
                pltpu.VMEM((bq_tile, c), jnp.float32),   # output accumulator
            ],
            compiler_params=pltpu.CompilerParams(
                dimension_semantics=("parallel", "parallel", "arbitrary"),
                vmem_limit_bytes=vmem2),
        )(q, k, v, x_ncs, wo_t, bo)

    return out_ncs.reshape(n, c, h, w)


# ------------------------------ reference ------------------------------------

def _reference(x, w_in, b_in, w_out, b_out):
    """Pure-JAX reference mirroring the PyTorch forward, with bf16 rounding at
    the same points as the kernel so the comparison tolerance stays tight."""
    n, c, h, w_sp = x.shape
    s = h * w_sp
    bf = jnp.bfloat16
    scale = 1.0 / math.sqrt(c)
    xs = jnp.transpose(x.reshape(n, c, s), (0, 2, 1)).astype(jnp.float32)   # (N,S,C)
    wq, wk, wv = w_in[:c], w_in[c:2 * c], w_in[2 * c:]
    bq, bk, bv = b_in[:c], b_in[c:2 * c], b_in[2 * c:]
    xb = xs.astype(bf)
    q = (jnp.einsum("nsc,dc->nsd", xb, wq.astype(bf),
                    preferred_element_type=jnp.float32) + bq) * scale
    k = jnp.einsum("nsc,dc->nsd", xb, wk.astype(bf),
                   preferred_element_type=jnp.float32) + bk
    v = jnp.einsum("nsc,dc->nsd", xb, wv.astype(bf),
                   preferred_element_type=jnp.float32) + bv
    q, k, v = q.astype(bf), k.astype(bf), v.astype(bf)
    scores = jnp.einsum("nqd,nkd->nqk", q, k, preferred_element_type=jnp.float32)
    p = jax.nn.softmax(scores, axis=-1)
    attn = jnp.einsum("nqk,nkd->nqd", p.astype(bf), v,
                      preferred_element_type=jnp.float32)
    out = jnp.einsum("nsd,cd->nsc", attn.astype(bf), w_out.astype(bf),
                     preferred_element_type=jnp.float32)
    out = out.astype(bf).astype(jnp.float32) + b_out + xs
    return jnp.transpose(out, (0, 2, 1)).reshape(n, c, h, w_sp)


# ------------------------------ test harness ---------------------------------

if __name__ == "__main__":
    # Small unit-test shape (channels divisible by 32 since nn.GroupNorm(32, C)
    # exists in __init__ even though forward never calls it).
    # For production benchmarking use C=512, S=4096..16384.
    N, C, H, W = 2, 32, 16, 16     # S = 256

    key = jax.random.PRNGKey(0)
    kx, k1, k2, k3, k4 = jax.random.split(key, 5)

    x = jax.random.normal(kx, (N, C, H, W), dtype=jnp.float32)

    # PyTorch SelfAttention(1, C) parameter shapes:
    #   in_proj.weight (3C, C), in_proj.bias (3C,)
    #   out_proj.weight (C, C), out_proj.bias (C,)
    init_scale = 1.0 / math.sqrt(C)
    w_in = jax.random.normal(k1, (3 * C, C), dtype=jnp.float32) * init_scale
    b_in = jax.random.normal(k2, (3 * C,), dtype=jnp.float32) * 0.01
    w_out = jax.random.normal(k3, (C, C), dtype=jnp.float32) * init_scale
    b_out = jax.random.normal(k4, (C,), dtype=jnp.float32) * 0.01

    y_ref = _reference(x, w_in, b_in, w_out, b_out)

    # Default path: whole-KV-resident attention (S=256 trivially fits VMEM).
    y = jax.block_until_ready(vae_attention_block(x, w_in, b_in, w_out, b_out))
    assert y.shape == (N, C, H, W)
    err = jnp.max(jnp.abs(y - y_ref))
    assert jnp.allclose(y, y_ref, atol=3e-2, rtol=3e-2), f"kv-resident mismatch: {err}"

    # Flash (online-softmax) path, forced with small tiles so the kv reduction
    # axis takes more than one step (covers the long-sequence / v7x code path).
    y2 = jax.block_until_ready(
        vae_attention_block(x, w_in, b_in, w_out, b_out,
                            force_flash=True, block_q=128, block_k=128))
    err2 = jnp.max(jnp.abs(y2 - y_ref))
    assert jnp.allclose(y2, y_ref, atol=3e-2, rtol=3e-2), f"flash mismatch: {err2}"

    print("KERNEL_OK")
</pallas_src>

<mosaic_0001>
module attributes {stable_mosaic.version = 11 : i64} {
  func.func @_proj_kernel(%arg0: i32, %arg1: i32, %arg2: memref<1x32x256xf32, #tpu.memory_space<vmem>>, %arg3: memref<32x32xbf16, #tpu.memory_space<vmem>>, %arg4: memref<32x32xbf16, #tpu.memory_space<vmem>>, %arg5: memref<32x32xbf16, #tpu.memory_space<vmem>>, %arg6: memref<1x32xf32, #tpu.memory_space<vmem>>, %arg7: memref<32x1xf32, #tpu.memory_space<vmem>>, %arg8: memref<1x32xf32, #tpu.memory_space<vmem>>, %arg9: memref<1x256x32xbf16, #tpu.memory_space<vmem>>, %arg10: memref<1x32x256xbf16, #tpu.memory_space<vmem>>, %arg11: memref<1x256x32xbf16, #tpu.memory_space<vmem>>) attributes {dimension_semantics = [#tpu.dimension_semantics<parallel>, #tpu.dimension_semantics<parallel>], iteration_bounds = array<i64: 2, 1>, scalar_prefetch = 0 : i64, scratch_operands = 0 : i64, tpu.core_type = #tpu.core_type<tc>, window_params = [{transform_indices = @transform_0, window_bounds = array<i64: 1, 32, 256>}, {pipeline_mode = #tpu.pipeline_mode<synchronous>, transform_indices = @transform_1, window_bounds = array<i64: 32, 32>}, {pipeline_mode = #tpu.pipeline_mode<synchronous>, transform_indices = @transform_2, window_bounds = array<i64: 32, 32>}, {pipeline_mode = #tpu.pipeline_mode<synchronous>, transform_indices = @transform_3, window_bounds = array<i64: 32, 32>}, {pipeline_mode = #tpu.pipeline_mode<synchronous>, transform_indices = @transform_4, window_bounds = array<i64: 1, 32>}, {pipeline_mode = #tpu.pipeline_mode<synchronous>, transform_indices = @transform_5, window_bounds = array<i64: 32, 1>}, {pipeline_mode = #tpu.pipeline_mode<synchronous>, transform_indices = @transform_6, window_bounds = array<i64: 1, 32>}, {transform_indices = @transform_7, window_bounds = array<i64: 1, 256, 32>}, {transform_indices = @transform_8, window_bounds = array<i64: 1, 32, 256>}, {transform_indices = @transform_9, window_bounds = array<i64: 1, 256, 32>}]} {
    %c0 = arith.constant 0 : index
    %c0_0 = arith.constant 0 : index
    %c0_1 = arith.constant 0 : index
    %0 = vector.load %arg2[%c0, %c0_0, %c0_1] : memref<1x32x256xf32, #tpu.memory_space<vmem>>, vector<1x32x256xf32>
    %1 = vector.shape_cast %0 : vector<1x32x256xf32> to vector<32x256xf32>
    %2 = arith.truncf %1 : vector<32x256xf32> to vector<32x256xbf16>
    %3 = tpu.transpose %2, [1, 0] : vector<32x256xbf16> -> vector<256x32xbf16>
    %c0_2 = arith.constant 0 : index
    %c0_3 = arith.constant 0 : index
    %4 = vector.load %arg3[%c0_2, %c0_3] : memref<32x32xbf16, #tpu.memory_space<vmem>>, vector<32x32xbf16>
    %cst = arith.constant dense<0.000000e+00> : vector<256x32xf32>
    %5 = tpu.matmul %3, %4, %cst {dimension_numbers = #tpu.dot_dimension_numbers<[1], [0], [0], [1], [0, 0, 1, 1], [], []>} : vector<256x32xbf16>, vector<32x32xbf16>, vector<256x32xf32> -> vector<256x32xf32>
    %c0_4 = arith.constant 0 : index
    %c0_5 = arith.constant 0 : index
    %6 = vector.load %arg6[%c0_4, %c0_5] : memref<1x32xf32, #tpu.memory_space<vmem>>, vector<1x32xf32>
    %7 = vector.broadcast %6 : vector<1x32xf32> to vector<256x32xf32>
    %8 = arith.addf %5, %7 : vector<256x32xf32>
    %cst_6 = arith.constant 0.176776692 : f32
    %9 = vector.broadcast %cst_6 : f32 to vector<256x32xf32>
    %10 = arith.mulf %8, %9 : vector<256x32xf32>
    %c0_7 = arith.constant 0 : index
    %c0_8 = arith.constant 0 : index
    %11 = vector.load %arg4[%c0_7, %c0_8] : memref<32x32xbf16, #tpu.memory_space<vmem>>, vector<32x32xbf16>
    %cst_9 = arith.constant dense<0.000000e+00> : vector<32x256xf32>
    %12 = tpu.matmul %11, %2, %cst_9 {dimension_numbers = #tpu.dot_dimension_numbers<[1], [0], [0], [1], [0, 0, 1, 1], [], []>} : vector<32x32xbf16>, vector<32x256xbf16>, vector<32x256xf32> -> vector<32x256xf32>
    %c0_10 = arith.constant 0 : index
    %c0_11 = arith.constant 0 : index
    %13 = vector.load %arg7[%c0_10, %c0_11] : memref<32x1xf32, #tpu.memory_space<vmem>>, vector<32x1xf32>
    %14 = vector.broadcast %13 : vector<32x1xf32> to vector<32x256xf32>
    %15 = arith.addf %12, %14 : vector<32x256xf32>
    %c0_12 = arith.constant 0 : index
    %c0_13 = arith.constant 0 : index
    %16 = vector.load %arg5[%c0_12, %c0_13] : memref<32x32xbf16, #tpu.memory_space<vmem>>, vector<32x32xbf16>
    %cst_14 = arith.constant dense<0.000000e+00> : vector<256x32xf32>
    %17 = tpu.matmul %3, %16, %cst_14 {dimension_numbers = #tpu.dot_dimension_numbers<[1], [0], [0], [1], [0, 0, 1, 1], [], []>} : vector<256x32xbf16>, vector<32x32xbf16>, vector<256x32xf32> -> vector<256x32xf32>
    %c0_15 = arith.constant 0 : index
    %c0_16 = arith.constant 0 : index
    %18 = vector.load %arg8[%c0_15, %c0_16] : memref<1x32xf32, #tpu.memory_space<vmem>>, vector<1x32xf32>
    %19 = vector.broadcast %18 : vector<1x32xf32> to vector<256x32xf32>
    %20 = arith.addf %17, %19 : vector<256x32xf32>
    %21 = arith.truncf %10 : vector<256x32xf32> to vector<256x32xbf16>
    %c0_17 = arith.constant 0 : index
    %c0_18 = arith.constant 0 : index
    %c0_19 = arith.constant 0 : index
    %22 = vector.load %arg9[%c0_17, %c0_18, %c0_19] : memref<1x256x32xbf16, #tpu.memory_space<vmem>>, vector<1x256x32xbf16>
    %23 = vector.shape_cast %22 : vector<1x256x32xbf16> to vector<256x32xbf16>
    %24 = vector.shape_cast %21 : vector<256x32xbf16> to vector<1x256x32xbf16>
    tpu.vector_store %arg9[%c0_17, %c0_18, %c0_19], %24 {strides = array<i32>} : memref<1x256x32xbf16, #tpu.memory_space<vmem>>, vector<1x256x32xbf16>,
    %25 = arith.truncf %15 : vector<32x256xf32> to vector<32x256xbf16>
    %c0_20 = arith.constant 0 : index
    %c0_21 = arith.constant 0 : index
    %c0_22 = arith.constant 0 : index
    %26 = vector.load %arg10[%c0_20, %c0_21, %c0_22] : memref<1x32x256xbf16, #tpu.memory_space<vmem>>, vector<1x32x256xbf16>
    %27 = vector.shape_cast %26 : vector<1x32x256xbf16> to vector<32x256xbf16>
    %28 = vector.shape_cast %25 : vector<32x256xbf16> to vector<1x32x256xbf16>
    tpu.vector_store %arg10[%c0_20, %c0_21, %c0_22], %28 {strides = array<i32>} : memref<1x32x256xbf16, #tpu.memory_space<vmem>>, vector<1x32x256xbf16>,
    %29 = arith.truncf %20 : vector<256x32xf32> to vector<256x32xbf16>
    %c0_23 = arith.constant 0 : index
    %c0_24 = arith.constant 0 : index
    %c0_25 = arith.constant 0 : index
    %30 = vector.load %arg11[%c0_23, %c0_24, %c0_25] : memref<1x256x32xbf16, #tpu.memory_space<vmem>>, vector<1x256x32xbf16>
    %31 = vector.shape_cast %30 : vector<1x256x32xbf16> to vector<256x32xbf16>
    %32 = vector.shape_cast %29 : vector<256x32xbf16> to vector<1x256x32xbf16>
    tpu.vector_store %arg11[%c0_23, %c0_24, %c0_25], %32 {strides = array<i32>} : memref<1x256x32xbf16, #tpu.memory_space<vmem>>, vector<1x256x32xbf16>,
    return
  }
  func.func @transform_0(%arg0: i32, %arg1: i32) -> (i32, i32, i32) {
    %c0_i32 = arith.constant 0 : i32
    %c0_i32_0 = arith.constant 0 : i32
    return %arg0, %c0_i32, %arg1 : i32, i32, i32
  }
  func.func @transform_1(%arg0: i32, %arg1: i32) -> (i32, i32) {
    %c0_i32 = arith.constant 0 : i32
    %c0_i32_0 = arith.constant 0 : i32
    %c0_i32_1 = arith.constant 0 : i32
    return %c0_i32, %c0_i32_0 : i32, i32
  }
  func.func @transform_2(%arg0: i32, %arg1: i32) -> (i32, i32) {
    %c0_i32 = arith.constant 0 : i32
    %c0_i32_0 = arith.constant 0 : i32
    %c0_i32_1 = arith.constant 0 : i32
    return %c0_i32, %c0_i32_0 : i32, i32
  }
  func.func @transform_3(%arg0: i32, %arg1: i32) -> (i32, i32) {
    %c0_i32 = arith.constant 0 : i32
    %c0_i32_0 = arith.constant 0 : i32
    %c0_i32_1 = arith.constant 0 : i32
    return %c0_i32, %c0_i32_0 : i32, i32
  }
  func.func @transform_4(%arg0: i32, %arg1: i32) -> (i32, i32) {
    %c0_i32 = arith.constant 0 : i32
    %c0_i32_0 = arith.constant 0 : i32
    %c0_i32_1 = arith.constant 0 : i32
    return %c0_i32, %c0_i32_0 : i32, i32
  }
  func.func @transform_5(%arg0: i32, %arg1: i32) -> (i32, i32) {
    %c0_i32 = arith.constant 0 : i32
    %c0_i32_0 = arith.constant 0 : i32
    %c0_i32_1 = arith.constant 0 : i32
    return %c0_i32, %c0_i32_0 : i32, i32
  }
  func.func @transform_6(%arg0: i32, %arg1: i32) -> (i32, i32) {
    %c0_i32 = arith.constant 0 : i32
    %c0_i32_0 = arith.constant 0 : i32
    %c0_i32_1 = arith.constant 0 : i32
    return %c0_i32, %c0_i32_0 : i32, i32
  }
  func.func @transform_7(%arg0: i32, %arg1: i32) -> (i32, i32, i32) {
    %c0_i32 = arith.constant 0 : i32
    %c0_i32_0 = arith.constant 0 : i32
    return %arg0, %arg1, %c0_i32 : i32, i32, i32
  }
  func.func @transform_8(%arg0: i32, %arg1: i32) -> (i32, i32, i32) {
    %c0_i32 = arith.constant 0 : i32
    %c0_i32_0 = arith.constant 0 : i32
    return %arg0, %c0_i32, %arg1 : i32, i32, i32
  }
  func.func @transform_9(%arg0: i32, %arg1: i32) -> (i32, i32, i32) {
    %c0_i32 = arith.constant 0 : i32
    %c0_i32_0 = arith.constant 0 : i32
    return %arg0, %arg1, %c0_i32 : i32, i32, i32
  }
}

</mosaic_0001>

<llo_original>
// kernel: tpu_custom_call.1
$region0: #{tpu_custom_call.1}
  #allocation0 [shape = 'u32[]', space=smem, size = 0x4, offset = 0x4, fixed_abs, tag = 'smem constant byte address 0x4 - core index']
  #allocation1 [shape = 'u32[144,128]{1,0:T(1,128)}', space=vmem, size = 0x12000, scoped, tag = 'internal scratch']
  %s0 = inlined_call_operand.hbm [shape: f32[2,32,256], index: 0, kind: input, shape index: {}]
  %s1 = inlined_call_operand.vmem [shape: bf16[32,32], index: 1, kind: input, shape index: {}]
  %s2 = inlined_call_operand.vmem [shape: bf16[32,32], index: 2, kind: input, shape index: {}]
  %s3 = inlined_call_operand.hbm [shape: bf16[32,32], index: 3, kind: input, shape index: {}]
  %s4 = inlined_call_operand.vmem [shape: f32[1,32], index: 4, kind: input, shape index: {}]
  %s5 = inlined_call_operand.vmem [shape: f32[32,1], index: 5, kind: input, shape index: {}]
  %s6 = inlined_call_operand.vmem [shape: f32[1,32], index: 6, kind: input, shape index: {}]
  %s7 = inlined_call_operand.vmem [shape: bf16[2,256,32], index: 7, kind: output, shape index: {0}]
  %s8 = inlined_call_operand.hbm [shape: bf16[2,32,256], index: 8, kind: output, shape index: {1}]
  %s9 = inlined_call_operand.vmem [shape: bf16[2,256,32], index: 9, kind: output, shape index: {2}]
  %10 = xla_tuple %s7, %s8, %s9
  %s11 = sld [smem:[#allocation0]]
  $region85: #{tpu_custom_call.1} parent=0
    _
  %s13 = ssub.s32 1, %s11
  %s14 = scalar_select 0, %s13, %s11
  $region1: #{tpu_custom_call.1} parent=0
    #allocation2 [shape = 'u8[65536]{0}', space=vmem, size = 0x10000, scoped, tag = 'input window, operand 0']
    #allocation3 [shape = 's32[2]{0}', space=sflag, size = 0x8, scoped, tag = 'scoped memory for tpu_custom_call.1']
    #allocation4 [shape = 's32[2]{0}', space=sflag, size = 0x8, scoped, tag = 'scoped memory for tpu_custom_call.1']
    #allocation5 [shape = 'u8[8192]{0}', space=vmem, size = 0x2000, scoped, tag = 'input window, operand 3, single buffered']
    #allocation6 [shape = 's32[1]{0}', space=sflag, size = 0x4, scoped, tag = 'scoped memory for tpu_custom_call.1']
    #allocation7 [shape = 'u8[32768]{0}', space=vmem, size = 0x8000, scoped, tag = 'output window, operand 1']
    %15 = vsyncpa [#allocation3], 0
    %s16 = scalar_lea.sflag [#allocation3], 1
    %17 = vsyncpa %s16, 0
    %18 = vsyncpa [#allocation6], 0
    %19 = vsyncpa [#allocation4], 0
    %s20 = scalar_lea.sflag [#allocation4], 1
    %21 = vsyncpa %s20, 0
    loop: start=0, step=1, limit=4
    $region2: #{tpu_custom_call.1} parent=1 // loop_pre_header
      _
    $region3: #{tpu_custom_call.1} parent=1 // loop_header
      %s23 = sphi 0, %s27
      %p24 = scmp.ge.s32.totalorder %s23, 4
      %s30 = sphi 0, %s42
      %s31 = sphi 0, %s38
      %s32 = sphi 0, %s30
      %s33 = sphi 0, %s31
      %s34 = sphi 0, %s32
      %s35 = sphi 0, %s33
      %s47 = sphi 0, %s49
      %s50 = sphi 0, %s47
      %s51 = sphi 0, %s50
      %s67 = sphi 0, %s51
      %s71 = sphi 0, %s71
      %s73 = sphi 0, %s71
      %s74 = sphi 0, %s73
      %s88 = sphi 0, %s74
      %s92 = sphi 0, %s92
      %s94 = sphi 0, %s92
      %s95 = sphi 0, %s94
      %s109 = sphi 0, %s95
      %s113 = sphi 0, %s113
      %s115 = sphi 0, %s113
      %s116 = sphi 0, %s115
      %s130 = sphi 0, %s116
      %s134 = sphi 0, %s134
      %s136 = sphi 0, %s134
      %s137 = sphi 0, %s136
      %s151 = sphi 0, %s137
      %s155 = sphi 0, %s155
      %s157 = sphi 0, %s155
      %s158 = sphi 0, %s157
      %s172 = sphi 0, %s158
      %s176 = sphi 0, %s176
      %s178 = sphi 0, %s176
      %s179 = sphi 0, %s178
      %s193 = sphi 0, %s179
      %s201 = sphi 0, %s203
      %s204 = sphi 0, %s201
      %s205 = sphi 0, %s204
      %s221 = sphi 0, %s205
      %s229 = sphi 0, %s231
      %s232 = sphi 0, %s229
      %s233 = sphi 0, %s232
      %s249 = sphi 0, %s233
      %s257 = sphi 0, %s259
      %s260 = sphi 0, %s257
      %s261 = sphi 0, %s260
      %s277 = sphi 0, %s261
    $region4: #{tpu_custom_call.1} parent=1 // loop_header_branch
      %26 = sbr.rel (%p24) target = $region8
    $region5: #{tpu_custom_call.1} parent=1 // loop_body
      %s28 = ssub.s32 %s23, 1
      %s29 = ssub.s32 %s23, 2
      %s36 = sadd.s32 1, %s31
      %p37 = scmp.ge.s32.totalorder %s36, 1
      %s38 = scalar_select %p37, 0, %s36
      %s39 = sadd.s32 1, %s30
      %s40 = scalar_select %p37, %s39, %s30
      %p41 = scmp.ge.s32.totalorder %s40, 2
      %s42 = scalar_select %p41, 0, %s40
      %s43 = ssub.s32 %s30, %s42
      %s44 = ssub.s32 %s31, %s38
      %s45 = sor.u32 %s43, %s44
      %p46 = scmp.eq.s32.totalorder %s45, 0
      %s48 = sadd.s32 %s47, 1
      %s49 = scalar_select %p46, %s47, %s48
      %p52 = pneg %p46
      %p53 = scmp.eq.s32.totalorder %s23, 1
      %p54 = por %p52, %p53
      %p55 = scmp.ne.s32.totalorder %s47, %s50
      %p56 = scmp.eq.s32.totalorder %s23, 0
      %p57 = por %p55, %p56
      %p58 = scmp.ne.s32.totalorder %s47, %s50
      %p59 = scmp.eq.s32.totalorder %s28, 1
      %p60 = por %p58, %p59
      %p61 = scmp.ne.s32.totalorder %s50, %s51
      %p62 = scmp.eq.s32.totalorder %s28, 0
      %p63 = por %p61, %p62
      %p64 = scmp.ne.s32.totalorder %s50, %s51
      %p65 = scmp.eq.s32.totalorder %s29, 1
      %p66 = por %p64, %p65
      %p68 = scmp.ne.s32.totalorder %s51, %s67
      %p69 = scmp.eq.s32.totalorder %s29, 0
      %p70 = por %p68, %p69
      %s72 = sadd.s32 %s71, 1
      %p75 = scmp.eq.s32.totalorder %s23, 1
      %p76 = scmp.ne.s32.totalorder %s71, %s73
      %p77 = scmp.eq.s32.totalorder %s23, 0
      %p78 = por %p76, %p77
      %p79 = scmp.ne.s32.totalorder %s71, %s73
      %p80 = scmp.eq.s32.totalorder %s28, 1
      %p81 = por %p79, %p80
      %p82 = scmp.ne.s32.totalorder %s73, %s74
      %p83 = scmp.eq.s32.totalorder %s28, 0
      %p84 = por %p82, %p83
      %p85 = scmp.ne.s32.totalorder %s73, %s74
      %p86 = scmp.eq.s32.totalorder %s29, 1
      %p87 = por %p85, %p86
      %p89 = scmp.ne.s32.totalorder %s74, %s88
      %p90 = scmp.eq.s32.totalorder %s29, 0
      %p91 = por %p89, %p90
      %s93 = sadd.s32 %s92, 1
      %p96 = scmp.eq.s32.totalorder %s23, 1
      %p97 = scmp.ne.s32.totalorder %s92, %s94
      %p98 = scmp.eq.s32.totalorder %s23, 0
      %p99 = por %p97, %p98
      %p100 = scmp.ne.s32.totalorder %s92, %s94
      %p101 = scmp.eq.s32.totalorder %s28, 1
      %p102 = por %p100, %p101
      %p103 = scmp.ne.s32.totalorder %s94, %s95
      %p104 = scmp.eq.s32.totalorder %s28, 0
      %p105 = por %p103, %p104
      %p106 = scmp.ne.s32.totalorder %s94, %s95
      %p107 = scmp.eq.s32.totalorder %s29, 1
      %p108 = por %p106, %p107
      %p110 = scmp.ne.s32.totalorder %s95, %s109
      %p111 = scmp.eq.s32.totalorder %s29, 0
      %p112 = por %p110, %p111
      %s114 = sadd.s32 %s113, 1
      %p117 = scmp.eq.s32.totalorder %s23, 1
      %p118 = scmp.ne.s32.totalorder %s113, %s115
      %p119 = scmp.eq.s32.totalorder %s23, 0
      %p120 = por %p118, %p119
      %p121 = scmp.ne.s32.totalorder %s113, %s115
      %p122 = scmp.eq.s32.totalorder %s28, 1
      %p123 = por %p121, %p122
      %p124 = scmp.ne.s32.totalorder %s115, %s116
      %p125 = scmp.eq.s32.totalorder %s28, 0
      %p126 = por %p124, %p125
      %p127 = scmp.ne.s32.totalorder %s115, %s116
      %p128 = scmp.eq.s32.totalorder %s29, 1
      %p129 = por %p127, %p128
      %p131 = scmp.ne.s32.totalorder %s116, %s130
      %p132 = scmp.eq.s32.totalorder %s29, 0
      %p133 = por %p131, %p132
      %s135 = sadd.s32 %s134, 1
      %p138 = scmp.eq.s32.totalorder %s23, 1
      %p139 = scmp.ne.s32.totalorder %s134, %s136
      %p140 = scmp.eq.s32.totalorder %s23, 0
      %p141 = por %p139, %p140
      %p142 = scmp.ne.s32.totalorder %s134, %s136
      %p143 = scmp.eq.s32.totalorder %s28, 1
      %p144 = por %p142, %p143
      %p145 = scmp.ne.s32.totalorder %s136, %s137
      %p146 = scmp.eq.s32.totalorder %s28, 0
      %p147 = por %p145, %p146
      %p148 = scmp.ne.s32.totalorder %s136, %s137
      %p149 = scmp.eq.s32.totalorder %s29, 1
      %p150 = por %p148, %p149
      %p152 = scmp.ne.s32.totalorder %s137, %s151
      %p153 = scmp.eq.s32.totalorder %s29, 0
      %p154 = por %p152, %p153
      %s156 = sadd.s32 %s155, 1
      %p159 = scmp.eq.s32.totalorder %s23, 1
      %p160 = scmp.ne.s32.totalorder %s155, %s157
      %p161 = scmp.eq.s32.totalorder %s23, 0
      %p162 = por %p160, %p161
      %p163 = scmp.ne.s32.totalorder %s155, %s157
      %p164 = scmp.eq.s32.totalorder %s28, 1
      %p165 = por %p163, %p164
      %p166 = scmp.ne.s32.totalorder %s157, %s158
      %p167 = scmp.eq.s32.totalorder %s28, 0
      %p168 = por %p166, %p167
      %p169 = scmp.ne.s32.totalorder %s157, %s158
      %p170 = scmp.eq.s32.totalorder %s29, 1
      %p171 = por %p169, %p170
      %p173 = scmp.ne.s32.totalorder %s158, %s172
      %p174 = scmp.eq.s32.totalorder %s29, 0
      %p175 = por %p173, %p174
      %s177 = sadd.s32 %s176, 1
      %p180 = scmp.eq.s32.totalorder %s23, 1
      %p181 = scmp.ne.s32.totalorder %s176, %s178
      %p182 = scmp.eq.s32.totalorder %s23, 0
      %p183 = por %p181, %p182
      %p184 = scmp.ne.s32.totalorder %s176, %s178
      %p185 = scmp.eq.s32.totalorder %s28, 1
      %p186 = por %p184, %p185
      %p187 = scmp.ne.s32.totalorder %s178, %s179
      %p188 = scmp.eq.s32.totalorder %s28, 0
      %p189 = por %p187, %p188
      %p190 = scmp.ne.s32.totalorder %s178, %s179
      %p191 = scmp.eq.s32.totalorder %s29, 1
      %p192 = por %p190, %p191
      %p194 = scmp.ne.s32.totalorder %s179, %s193
      %p195 = scmp.eq.s32.totalorder %s29, 0
      %p196 = por %p194, %p195
      %s197 = ssub.s32 %s30, %s42
      %s198 = ssub.s32 %s31, %s38
      %s199 = sor.u32 %s197, %s198
      %p200 = scmp.eq.s32.totalorder %s199, 0
      %s202 = sadd.s32 %s201, 1
      %s203 = scalar_select %p200, %s201, %s202
      %p206 = pneg %p200
      %p207 = scmp.eq.s32.totalorder %s23, 1
      %p208 = por %p206, %p207
      %p209 = scmp.ne.s32.totalorder %s201, %s204
      %p210 = scmp.eq.s32.totalorder %s23, 0
      %p211 = por %p209, %p210
      %p212 = scmp.ne.s32.totalorder %s201, %s204
      %p213 = scmp.eq.s32.totalorder %s28, 1
      %p214 = por %p212, %p213
      %p215 = scmp.ne.s32.totalorder %s204, %s205
      %p216 = scmp.eq.s32.totalorder %s28, 0
      %p217 = por %p215, %p216
      %p218 = scmp.ne.s32.totalorder %s204, %s205
      %p219 = scmp.eq.s32.totalorder %s29, 1
      %p220 = por %p218, %p219
      %p222 = scmp.ne.s32.totalorder %s205, %s221
      %p223 = scmp.eq.s32.totalorder %s29, 0
      %p224 = por %p222, %p223
      %s225 = ssub.s32 %s30, %s42
      %s226 = ssub.s32 %s31, %s38
      %s227 = sor.u32 %s225, %s226
      %p228 = scmp.eq.s32.totalorder %s227, 0
      %s230 = sadd.s32 %s229, 1
      %s231 = scalar_select %p228, %s229, %s230
      %p234 = pneg %p228
      %p235 = scmp.eq.s32.totalorder %s23, 1
      %p236 = por %p234, %p235
      %p237 = scmp.ne.s32.totalorder %s229, %s232
      %p238 = scmp.eq.s32.totalorder %s23, 0
      %p239 = por %p237, %p238
      %p240 = scmp.ne.s32.totalorder %s229, %s232
      %p241 = scmp.eq.s32.totalorder %s28, 1
      %p242 = por %p240, %p241
      %p243 = scmp.ne.s32.totalorder %s232, %s233
      %p244 = scmp.eq.s32.totalorder %s28, 0
      %p245 = por %p243, %p244
      %p246 = scmp.ne.s32.totalorder %s232, %s233
      %p247 = scmp.eq.s32.totalorder %s29, 1
      %p248 = por %p246, %p247
      %p250 = scmp.ne.s32.totalorder %s233, %s249
      %p251 = scmp.eq.s32.totalorder %s29, 0
      %p252 = por %p250, %p251
      %s253 = ssub.s32 %s30, %s42
      %s254 = ssub.s32 %s31, %s38
      %s255 = sor.u32 %s253, %s254
      %p256 = scmp.eq.s32.totalorder %s255, 0
      %s258 = sadd.s32 %s257, 1
      %s259 = scalar_select %p256, %s257, %s258
      %p262 = pneg %p256
      %p263 = scmp.eq.s32.totalorder %s23, 1
      %p264 = por %p262, %p263
      %p265 = scmp.ne.s32.totalorder %s257, %s260
      %p266 = scmp.eq.s32.totalorder %s23, 0
      %p267 = por %p265, %p266
      %p268 = scmp.ne.s32.totalorder %s257, %s260
      %p269 = scmp.eq.s32.totalorder %s28, 1
      %p270 = por %p268, %p269
      %p271 = scmp.ne.s32.totalorder %s260, %s261
      %p272 = scmp.eq.s32.totalorder %s28, 0
      %p273 = por %p271, %p272
      %p274 = scmp.ne.s32.totalorder %s260, %s261
      %p275 = scmp.eq.s32.totalorder %s29, 1
      %p276 = por %p274, %p275
      %p278 = scmp.ne.s32.totalorder %s261, %s277
      %p279 = scmp.eq.s32.totalorder %s29, 0
      %p280 = por %p278, %p279
      %p281 = scmp.le.s32.totalorder 1, %s23
      %p282 = scmp.lt.s32.totalorder %s23, 3
      %p283 = pnand %p281, %p282
      %p284 = pneg %p283
      // Predicated region
      $region9: #{tpu_custom_call.1} parent=5 // pred_check
        _
      $region10: #{tpu_custom_call.1} parent=5 // pred_check_branch
        %286 = sbr.rel (%p283) target = $region12
      $region11: #{tpu_custom_call.1} parent=5 // pred_region
        %s287 = ssub.s32 %s23, 1
        // Predicated region
        $region13: #{tpu_custom_call.1} parent=11 // pred_check
          %p288 = pneg %p84
        $region14: #{tpu_custom_call.1} parent=11 // pred_check_branch
          %290 = sbr.rel (%p288) target = $region16
        $region15: #{tpu_custom_call.1} parent=11 // pred_region
          _
        $region16: #{tpu_custom_call.1} parent=11 // pred_fallthru
          _
        // Predicated region
        $region17: #{tpu_custom_call.1} parent=11 // pred_check
          %p291 = pneg %p105
        $region18: #{tpu_custom_call.1} parent=11 // pred_check_branch
          %293 = sbr.rel (%p291) target = $region20
        $region19: #{tpu_custom_call.1} parent=11 // pred_region
          _
        $region20: #{tpu_custom_call.1} parent=11 // pred_fallthru
          _
        // Predicated region
        $region21: #{tpu_custom_call.1} parent=11 // pred_check
          %p294 = pneg %p126
        $region22: #{tpu_custom_call.1} parent=11 // pred_check_branch
          %296 = sbr.rel (%p294) target = $region24
        $region23: #{tpu_custom_call.1} parent=11 // pred_region
          %s298 = ssub.s32 256, 256
          %299 = vsyncadd [#allocation6], %s298
          %s300 = sshll.u32 [#allocation5], 4
          %s301 = int_to_ptr.vmem [resolvable:$true] %s300
          %306 = dma.hbm_to_vmem [thread:$0]  %s3, 256, %s301, [#allocation6], 64, 64, 4
        $region24: #{tpu_custom_call.1} parent=11 // pred_fallthru
          _
        // Predicated region
        $region25: #{tpu_custom_call.1} parent=11 // pred_check
          %p307 = pneg %p147
        $region26: #{tpu_custom_call.1} parent=11 // pred_check_branch
          %309 = sbr.rel (%p307) target = $region28
        $region27: #{tpu_custom_call.1} parent=11 // pred_region
          _
        $region28: #{tpu_custom_call.1} parent=11 // pred_fallthru
          _
        // Predicated region
        $region29: #{tpu_custom_call.1} parent=11 // pred_check
          %p310 = pneg %p168
        $region30: #{tpu_custom_call.1} parent=11 // pred_check_branch
          %312 = sbr.rel (%p310) target = $region32
        $region31: #{tpu_custom_call.1} parent=11 // pred_region
          _
        $region32: #{tpu_custom_call.1} parent=11 // pred_fallthru
          _
        // Predicated region
        $region33: #{tpu_custom_call.1} parent=11 // pred_check
          %p313 = pneg %p189
        $region34: #{tpu_custom_call.1} parent=11 // pred_check_branch
          %315 = sbr.rel (%p313) target = $region36
        $region35: #{tpu_custom_call.1} parent=11 // pred_region
          _
        $region36: #{tpu_custom_call.1} parent=11 // pred_fallthru
          _
      $region12: #{tpu_custom_call.1} parent=5 // pred_fallthru
        _
      %p316 = scmp.lt.s32.totalorder %s23, 2
      // Predicated region
      $region37: #{tpu_custom_call.1} parent=5 // pred_check
        %p317 = pneg %p316
      $region38: #{tpu_custom_call.1} parent=5 // pred_check_branch
        %319 = sbr.rel (%p317) target = $region40
      $region39: #{tpu_custom_call.1} parent=5 // pred_region
        // Predicated region
        $region41: #{tpu_custom_call.1} parent=39 // pred_check
          %p320 = pneg %p57
        $region42: #{tpu_custom_call.1} parent=39 // pred_check_branch
          %322 = sbr.rel (%p320) target = $region44
        $region43: #{tpu_custom_call.1} parent=39 // pred_region
          %s323 = sand.u32 %s47, 1
          %s324 = scalar_lea.sflag [#allocation3], %s323
          %s325 = sand.u32 %s47, 1
          %s326 = smul.addr %s325, 64
          %s327 = scalar_lea.vmem [#allocation2], %s326
          %s328 = smul.u32 2, %s31
          %s330 = ssub.s32 1024, 1024
          %331 = vsyncadd %s324, %s330
          %s332 = smul.addr %s30, 8
          %s333 = sadd.s32 %s328, %s332
          %s334 = smul.addr %s333, 128
          %s335 = scalar_lea.hbm %s0, %s334
          %s336 = sshll.u32 %s327, 4
          %s337 = int_to_ptr.vmem [resolvable:$true] %s336
          %342 = dma.hbm_to_vmem [thread:$0]  %s335, 1024, %s337, %s324, 256, 256, 16
        $region44: #{tpu_custom_call.1} parent=39 // pred_fallthru
          _
      $region40: #{tpu_custom_call.1} parent=5 // pred_fallthru
        _
      %p343 = scmp.le.s32.totalorder 1, %s23
      %p344 = scmp.lt.s32.totalorder %s23, 3
      %p345 = pnand %p343, %p344
      %p346 = pneg %p345
      // Predicated region
      $region45: #{tpu_custom_call.1} parent=5 // pred_check
        _
      $region46: #{tpu_custom_call.1} parent=5 // pred_check_branch
        %348 = sbr.rel (%p345) target = $region48
      $region47: #{tpu_custom_call.1} parent=5 // pred_region
        %s349 = ssub.s32 %s23, 1
        %s350 = sand.u32 %s50, 1
        %s351 = scalar_lea.sflag [#allocation3], %s350
        %s352 = sand.u32 %s50, 1
        %s353 = smul.addr %s352, 64
        %s354 = scalar_lea.vmem [#allocation2], %s353
        // Predicated region
        $region49: #{tpu_custom_call.1} parent=47 // pred_check
          %p355 = pneg %p63
        $region50: #{tpu_custom_call.1} parent=47 // pred_check_branch
          %357 = sbr.rel (%p355) target = $region52
        $region51: #{tpu_custom_call.1} parent=47 // pred_region
          %358 = dma.done %s351, 1024
        $region52: #{tpu_custom_call.1} parent=47 // pred_fallthru
          _
        // Predicated region
        $region53: #{tpu_custom_call.1} parent=47 // pred_check
          %p359 = pneg %p126
        $region54: #{tpu_custom_call.1} parent=47 // pred_check_branch
          %361 = sbr.rel (%p359) target = $region56
        $region55: #{tpu_custom_call.1} parent=47 // pred_region
          %362 = dma.done [#allocation6], 256
        $region56: #{tpu_custom_call.1} parent=47 // pred_fallthru
          _
        %s363 = sand.u32 %s50, 1
        %s364 = scalar_lea.sflag [#allocation3], %s363
        %s365 = sand.u32 %s50, 1
        %s366 = smul.addr %s365, 64
        %s367 = scalar_lea.vmem [#allocation2], %s366
        %p368 = pneg %p63
        %p369 = pneg %p60
        %p370 = pneg %p84
        %p371 = pneg %p81
        %p372 = pneg %p105
        %p373 = pneg %p102
        %p374 = pneg %p126
        %p375 = pneg %p123
        %p376 = pneg %p147
        %p377 = pneg %p144
        %p378 = pneg %p168
        %p379 = pneg %p165
        %p380 = pneg %p189
        %p381 = pneg %p186
        %p382 = pneg %p217
        %p383 = pneg %p214
        %s384 = smul.u32 32, %s33
        %p385 = scmp.lt.s32.totalorder %s32, 1
        %s386 = scalar_select %p385, %s32, 1
        %p387 = scmp.lt.s32.totalorder %s384, 31
        %s388 = scalar_select %p387, %s384, 31
        %s389 = smul.addr %s386, 32
        %s390 = sadd.s32 %s388, %s389
        %s391 = smul.addr %s390, 4
        %s392 = scalar_lea.vmem %s7, %s391
        %p393 = pneg %p245
        %p394 = pneg %p242
        %s395 = sand.u32 %s232, 1
        %s396 = scalar_lea.sflag [#allocation4], %s395
        %s397 = sand.u32 %s232, 1
        %s398 = smul.addr %s397, 32
        %s399 = scalar_lea.vmem [#allocation7], %s398
        %p400 = pneg %p273
        %p401 = pneg %p270
        %s402 = smul.u32 32, %s33
        %p403 = scmp.lt.s32.totalorder %s32, 1
        %s404 = scalar_select %p403, %s32, 1
        %p405 = scmp.lt.s32.totalorder %s402, 31
        %s406 = scalar_select %p405, %s402, 31
        %s407 = smul.addr %s404, 32
        %s408 = sadd.s32 %s406, %s407
        %s409 = smul.addr %s408, 4
        %s410 = scalar_lea.vmem %s9, %s409
        %s411 = smul.u32 2, %s33
        %s412 = smul.u32 32, %s33
        %p413 = scmp.lt.s32.totalorder %s32, 1
        %s414 = scalar_select %p413, %s32, 1
        %p415 = scmp.lt.s32.totalorder %s412, 31
        %s416 = scalar_select %p415, %s412, 31
        %s417 = smul.addr %s414, 32
        %s418 = sadd.s32 %s416, %s417
        %s419 = smul.addr %s418, 4
        %s420 = scalar_lea.vmem %s7, %s419
        %s421 = smul.u32 32, %s33
        %s422 = smul.u32 2, %s33
        %s423 = smul.u32 32, %s33
        %p424 = scmp.lt.s32.totalorder %s32, 1
        %s425 = scalar_select %p424, %s32, 1
        %p426 = scmp.lt.s32.totalorder %s423, 31
        %s427 = scalar_select %p426, %s423, 31
        %s428 = smul.addr %s425, 32
        %s429 = sadd.s32 %s427, %s428
        %s430 = smul.addr %s429, 4
        %s431 = scalar_lea.vmem %s9, %s430
        %s432 = smul.u32 32, %s33
        %v434 = vld [vmem:[%s354] sm:$0xff]
        %v435 = vld [vmem:[%s354 + $0x8] sm:$0xff]
        %v436 = vld [vmem:[%s354 + $0x10] sm:$0xff]
        %v437 = vld [vmem:[%s354 + $0x18] sm:$0xff]
        %v438 = vld [vmem:[%s354 + $0x20] sm:$0xff]
        %v439 = vld [vmem:[%s354 + $0x28] sm:$0xff]
        %v440 = vld [vmem:[%s354 + $0x30] sm:$0xff]
        %v441 = vld [vmem:[%s354 + $0x38] sm:$0xff]
        %v442 = vpack.c.bf16 %v436, %v434
        %v443 = vpack.c.bf16 %v437, %v435
        %v444 = vpack.c.bf16 %v440, %v438
        %v445 = vpack.c.bf16 %v441, %v439
        %446 = vxpose.xlu0.c.b16.start [1/8] %v442, 128
        %447 = vxpose.xlu0.c.b16.cont [2/8] %v444, 128
        %448 = vxpose.xlu0.c.b16.cont [3/8] 0, 128
        %449 = vxpose.xlu0.c.b16.cont [4/8] 0, 128
        %450 = vxpose.xlu0.c.b16.cont [5/8] 0, 128
        %451 = vxpose.xlu0.c.b16.cont [6/8] 0, 128
        %452 = vxpose.xlu0.c.b16.cont [7/8] 0, 128
        %453 = vxpose.xlu0.c.b16.end [8/8] 0, 128
        %v454 = vpop.trf.xlu0
        %v455 = vpop.trf.xlu0
        %v456 = vpop.trf.xlu0
        %v457 = vpop.trf.xlu0
        %v458 = vpop.trf.xlu0
        %v459 = vpop.trf.xlu0
        %v460 = vpop.trf.xlu0
        %v461 = vpop.trf.xlu0
        %462 = vxpose.xlu0.c.b16.start [1/8] %v443, 128
        %463 = vxpose.xlu0.c.b16.cont [2/8] %v445, 128
        %464 = vxpose.xlu0.c.b16.cont [3/8] 0, 128
        %465 = vxpose.xlu0.c.b16.cont [4/8] 0, 128
        %466 = vxpose.xlu0.c.b16.cont [5/8] 0, 128
        %467 = vxpose.xlu0.c.b16.cont [6/8] 0, 128
        %468 = vxpose.xlu0.c.b16.cont [7/8] 0, 128
        %469 = vxpose.xlu0.c.b16.end [8/8] 0, 128
        %v470 = vpop.trf.xlu0
        %v471 = vpop.trf.xlu0
        %v472 = vpop.trf.xlu0
        %v473 = vpop.trf.xlu0
        %v474 = vpop.trf.xlu0
        %v475 = vpop.trf.xlu0
        %v476 = vpop.trf.xlu0
        %v477 = vpop.trf.xlu0
        %v478 = vld [vmem:[%s1] sm:$0xf]
        %v479 = vld [vmem:[%s1 + $0x4] sm:$0xf]
        %v480 = vld [vmem:[%s1 + $0x8] sm:$0xf]
        %v481 = vld [vmem:[%s1 + $0xc] sm:$0xf]
        %v482 = vld [vmem:[%s4] sm:$0x1]
        %v484 = vlaneseq
        %v485 = vshrl.u32 %v484, 7
        %v486 = vsub.s32 0, %v485
        %v487 = vrot.slane %v482, %v486
        %v493 = vunpack.c.l.b16 %v478
        %v494 = vunpack.c.l.b16 %v479
        %v495 = vunpack.c.l.b16 %v480
        %v496 = vunpack.c.l.b16 %v481
        %v497 = vpack.c.b16 %v494, %v493
        %v498 = vpack.c.b16 %v496, %v495
        %vm501 = vcmask 261120
        %v503 = vsel %vm501, %v454, 0
        %v506 = vsel %vm501, %v455, 0
        %v509 = vsel %vm501, %v456, 0
        %v512 = vsel %vm501, %v457, 0
        %v515 = vsel %vm501, %v458, 0
        %v518 = vsel %vm501, %v459, 0
        %v521 = vsel %vm501, %v460, 0
        %v524 = vsel %vm501, %v461, 0
        %v527 = vsel %vm501, %v470, 0
        %v530 = vsel %vm501, %v471, 0
        %v533 = vsel %vm501, %v472, 0
        %v536 = vsel %vm501, %v473, 0
        %v539 = vsel %vm501, %v474, 0
        %v542 = vsel %vm501, %v475, 0
        %v545 = vsel %vm501, %v476, 0
        %v548 = vsel %vm501, %v477, 0
        %550 = vmatprep.subr.bf16.mxu0 0
        %551 = vmatpush1.bf16.msra.mxu0 %v497
        %552 = vmatprep.subr.bf16.mxu0 0
        %553 = vmatpush1.bf16.msra.mxu0 %v498
        %554 = vmatprep.subr.bf16.mxu0 0
        %555 = vmatpush1.bf16.msra.mxu0 0
        %556 = vmatprep.subr.bf16.mxu0 0
        %557 = vmatpush1.bf16.msra.mxu0 0
        %558 = vmatprep.subr.bf16.mxu0 0
        %559 = vmatpush1.bf16.msra.mxu0 0
        %560 = vmatprep.subr.bf16.mxu0 0
        %561 = vmatpush1.bf16.msra.mxu0 0
        %562 = vmatprep.subr.bf16.mxu0 0
        %563 = vmatpush1.bf16.msra.mxu0 0
        %564 = vmatprep.subr.bf16.mxu0 0
        %565 = vmatpush1.bf16.msra.mxu0 0
        %566 = vmatprep.subr.bf16.mxu0 0
        %567 = vmatpush1.bf16.msra.mxu0 0
        %568 = vmatprep.subr.bf16.mxu0 0
        %569 = vmatpush1.bf16.msra.mxu0 0
        %570 = vmatprep.subr.bf16.mxu0 0
        %571 = vmatpush1.bf16.msra.mxu0 0
        %572 = vmatprep.subr.bf16.mxu0 0
        %573 = vmatpush1.bf16.msra.mxu0 0
        %574 = vmatprep.subr.bf16.mxu0 0
        %575 = vmatpush1.bf16.msra.mxu0 0
        %576 = vmatprep.subr.bf16.mxu0 0
        %577 = vmatpush1.bf16.msra.mxu0 0
        %578 = vmatprep.subr.bf16.mxu0 0
        %579 = vmatpush1.bf16.msra.mxu0 0
        %580 = vmatprep.subr.bf16.mxu0 0
        %581 = vmatpush1.bf16.msra.mxu0 0
        %582 = vmatprep.mubr.bf16.mxu0 0
        %583 = vmatmul.mubr.bf16.gmra.mrb[0].mxu0 %v503
        %v584 = vpop.f32.mrb[0].mxu0
        %v585 = vadd.f32 %v487, %v584
        %v586 = vpop.f32.mrb[0].mxu0
        %v587 = vpop.f32.mrb[0].mxu0
        %v588 = vadd.f32 %v487, %v587
        %v589 = vpop.f32.mrb[0].mxu0
        %590 = vmatprep.mubr.bf16.mxu0 0
        %591 = vmatmul.mubr.bf16.gmra.mrb[0].mxu0 %v506
        %v592 = vpop.f32.mrb[0].mxu0
        %v593 = vadd.f32 %v487, %v592
        %v594 = vpop.f32.mrb[0].mxu0
        %v595 = vpop.f32.mrb[0].mxu0
        %v596 = vadd.f32 %v487, %v595
        %v597 = vpop.f32.mrb[0].mxu0
        %598 = vmatprep.mubr.bf16.mxu0 0
        %599 = vmatmul.mubr.bf16.gmra.mrb[0].mxu0 %v509
        %v600 = vpop.f32.mrb[0].mxu0
        %v601 = vadd.f32 %v487, %v600
        %v602 = vpop.f32.mrb[0].mxu0
        %v603 = vpop.f32.mrb[0].mxu0
        %v604 = vadd.f32 %v487, %v603
        %v605 = vpop.f32.mrb[0].mxu0
        %606 = vmatprep.mubr.bf16.mxu0 0
        %607 = vmatmul.mubr.bf16.gmra.mrb[0].mxu0 %v512
        %v608 = vpop.f32.mrb[0].mxu0
        %v609 = vadd.f32 %v487, %v608
        %v610 = vpop.f32.mrb[0].mxu0
        %v611 = vpop.f32.mrb[0].mxu0
        %v612 = vadd.f32 %v487, %v611
        %v613 = vpop.f32.mrb[0].mxu0
        %614 = vmatprep.mubr.bf16.mxu0 0
        %615 = vmatmul.mubr.bf16.gmra.mrb[0].mxu0 %v515
        %v616 = vpop.f32.mrb[0].mxu0
        %v617 = vadd.f32 %v487, %v616
        %v618 = vpop.f32.mrb[0].mxu0
        %v619 = vpop.f32.mrb[0].mxu0
        %v620 = vadd.f32 %v487, %v619
        %v621 = vpop.f32.mrb[0].mxu0
        %622 = vmatprep.mubr.bf16.mxu0 0
        %623 = vmatmul.mubr.bf16.gmra.mrb[0].mxu0 %v518
        %v624 = vpop.f32.mrb[0].mxu0
        %v625 = vadd.f32 %v487, %v624
        %v626 = vpop.f32.mrb[0].mxu0
        %v627 = vpop.f32.mrb[0].mxu0
        %v628 = vadd.f32 %v487, %v627
        %v629 = vpop.f32.mrb[0].mxu0
        %630 = vmatprep.mubr.bf16.mxu0 0
        %631 = vmatmul.mubr.bf16.gmra.mrb[0].mxu0 %v521
        %v632 = vpop.f32.mrb[0].mxu0
        %v633 = vadd.f32 %v487, %v632
        %v634 = vpop.f32.mrb[0].mxu0
        %v635 = vpop.f32.mrb[0].mxu0
        %v636 = vadd.f32 %v487, %v635
        %v637 = vpop.f32.mrb[0].mxu0
        %638 = vmatprep.mubr.bf16.mxu0 0
        %639 = vmatmul.mubr.bf16.gmra.mrb[0].mxu0 %v524
        %v640 = vpop.f32.mrb[0].mxu0
        %v641 = vadd.f32 %v487, %v640
        %v642 = vpop.f32.mrb[0].mxu0
        %v643 = vpop.f32.mrb[0].mxu0
        %v644 = vadd.f32 %v487, %v643
        %v645 = vpop.f32.mrb[0].mxu0
        %646 = vmatprep.mubr.bf16.mxu0 0
        %647 = vmatmul.mubr.bf16.gmra.mrb[0].mxu0 %v527
        %v648 = vpop.f32.mrb[0].mxu0
        %v649 = vadd.f32 %v487, %v648
        %v650 = vpop.f32.mrb[0].mxu0
        %v651 = vpop.f32.mrb[0].mxu0
        %v652 = vadd.f32 %v487, %v651
        %v653 = vpop.f32.mrb[0].mxu0
        %654 = vmatprep.mubr.bf16.mxu0 0
        %655 = vmatmul.mubr.bf16.gmra.mrb[0].mxu0 %v530
        %v656 = vpop.f32.mrb[0].mxu0
        %v657 = vadd.f32 %v487, %v656
        %v658 = vpop.f32.mrb[0].mxu0
        %v659 = vpop.f32.mrb[0].mxu0
        %v660 = vadd.f32 %v487, %v659
        %v661 = vpop.f32.mrb[0].mxu0
        %662 = vmatprep.mubr.bf16.mxu0 0
        %663 = vmatmul.mubr.bf16.gmra.mrb[0].mxu0 %v533
        %v664 = vpop.f32.mrb[0].mxu0
        %v665 = vadd.f32 %v487, %v664
        %v666 = vpop.f32.mrb[0].mxu0
        %v667 = vpop.f32.mrb[0].mxu0
        %v668 = vadd.f32 %v487, %v667
        %v669 = vpop.f32.mrb[0].mxu0
        %670 = vmatprep.mubr.bf16.mxu0 0
        %671 = vmatmul.mubr.bf16.gmra.mrb[0].mxu0 %v536
        %v672 = vpop.f32.mrb[0].mxu0
        %v673 = vadd.f32 %v487, %v672
        %v674 = vpop.f32.mrb[0].mxu0
        %v675 = vpop.f32.mrb[0].mxu0
        %v676 = vadd.f32 %v487, %v675
        %v677 = vpop.f32.mrb[0].mxu0
        %678 = vmatprep.mubr.bf16.mxu0 0
        %679 = vmatmul.mubr.bf16.gmra.mrb[0].mxu0 %v539
        %v680 = vpop.f32.mrb[0].mxu0
        %v681 = vadd.f32 %v487, %v680
        %v682 = vpop.f32.mrb[0].mxu0
        %v683 = vpop.f32.mrb[0].mxu0
        %v684 = vadd.f32 %v487, %v683
        %v685 = vpop.f32.mrb[0].mxu0
        %686 = vmatprep.mubr.bf16.mxu0 0
        %687 = vmatmul.mubr.bf16.gmra.mrb[0].mxu0 %v542
        %v688 = vpop.f32.mrb[0].mxu0
        %v689 = vadd.f32 %v487, %v688
        %v690 = vpop.f32.mrb[0].mxu0
        %v691 = vpop.f32.mrb[0].mxu0
        %v692 = vadd.f32 %v487, %v691
        %v693 = vpop.f32.mrb[0].mxu0
        %694 = vmatprep.mubr.bf16.mxu0 0
        %695 = vmatmul.mubr.bf16.gmra.mrb[0].mxu0 %v545
        %v696 = vpop.f32.mrb[0].mxu0
        %v697 = vadd.f32 %v487, %v696
        %v698 = vpop.f32.mrb[0].mxu0
        %v699 = vpop.f32.mrb[0].mxu0
        %v700 = vadd.f32 %v487, %v699
        %v701 = vpop.f32.mrb[0].mxu0
        %702 = vmatprep.mubr.bf16.mxu0 0
        %703 = vmatmul.mubr.bf16.gmra.mrb[0].mxu0 %v548
        %v704 = vpop.f32.mrb[0].mxu0
        %v705 = vadd.f32 %v487, %v704
        %v706 = vpop.f32.mrb[0].mxu0
        %v707 = vpop.f32.mrb[0].mxu0
        %v708 = vadd.f32 %v487, %v707
        %v709 = vpop.f32.mrb[0].mxu0
        %710 = vdwg.mxu0
        %v711 = vmul.f32 %v585, 0.17677669
        %v712 = vmul.f32 %v588, 0.17677669
        %v713 = vmul.f32 %v593, 0.17677669
        %v714 = vmul.f32 %v596, 0.17677669
        %v715 = vmul.f32 %v601, 0.17677669
        %v716 = vmul.f32 %v604, 0.17677669
        %v717 = vmul.f32 %v609, 0.17677669
        %v718 = vmul.f32 %v612, 0.17677669
        %v719 = vmul.f32 %v617, 0.17677669
        %v720 = vmul.f32 %v620, 0.17677669
        %v721 = vmul.f32 %v625, 0.17677669
        %v722 = vmul.f32 %v628, 0.17677669
        %v723 = vmul.f32 %v633, 0.17677669
        %v724 = vmul.f32 %v636, 0.17677669
        %v725 = vmul.f32 %v641, 0.17677669
        %v726 = vmul.f32 %v644, 0.17677669
        %v727 = vmul.f32 %v649, 0.17677669
        %v728 = vmul.f32 %v652, 0.17677669
        %v729 = vmul.f32 %v657, 0.17677669
        %v730 = vmul.f32 %v660, 0.17677669
        %v731 = vmul.f32 %v665, 0.17677669
        %v732 = vmul.f32 %v668, 0.17677669
        %v733 = vmul.f32 %v673, 0.17677669
        %v734 = vmul.f32 %v676, 0.17677669
        %v735 = vmul.f32 %v681, 0.17677669
        %v736 = vmul.f32 %v684, 0.17677669
        %v737 = vmul.f32 %v689, 0.17677669
        %v738 = vmul.f32 %v692, 0.17677669
        %v739 = vmul.f32 %v697, 0.17677669
        %v740 = vmul.f32 %v700, 0.17677669
        %v741 = vmul.f32 %v705, 0.17677669
        %v742 = vmul.f32 %v708, 0.17677669
        %v743 = vld [vmem:[%s2] sm:$0xf]
        %v744 = vld [vmem:[%s2 + $0x4] sm:$0xf]
        %v745 = vld [vmem:[%s2 + $0x8] sm:$0xf]
        %v746 = vld [vmem:[%s2 + $0xc] sm:$0xf]
        %v747 = vld [vmem:[%s5] sm:$0xff]
        %v748 = vld [vmem:[%s5 + $0x8] sm:$0xff]
        %v749 = vld [vmem:[%s5 + $0x10] sm:$0xff]
        %v750 = vld [vmem:[%s5 + $0x18] sm:$0xff]
        %752 = vset.pattern.permute.xlu0 0
        %753 = vperm.xlu0 %752, %v747
        %v754 = vpop.permute.xlu0 %753
        %757 = vset.pattern.permute.xlu0 0
        %758 = vperm.xlu0 %757, %v748
        %v759 = vpop.permute.xlu0 %758
        %762 = vset.pattern.permute.xlu0 0
        %763 = vperm.xlu0 %762, %v749
        %v764 = vpop.permute.xlu0 %763
        %767 = vset.pattern.permute.xlu0 0
        %768 = vperm.xlu0 %767, %v750
        %v769 = vpop.permute.xlu0 %768
        %v775 = vunpack.c.l.b16 %v743
        %v776 = vunpack.c.l.b16 %v744
        %v777 = vunpack.c.l.b16 %v745
        %v778 = vunpack.c.l.b16 %v746
        %v779 = vpack.c.b16 %v776, %v775
        %v780 = vpack.c.b16 %v778, %v777
        %v782 = vsel %vm501, %v779, 0
        %v785 = vsel %vm501, %v780, 0
        %787 = vmatprep.subr.bf16.mxu0 %v443
        %788 = vmatpush1.bf16.msra.mxu0 %v442
        %789 = vmatprep.subr.bf16.mxu0 %v445
        %790 = vmatpush1.bf16.msra.mxu0 %v444
        %791 = vmatprep.subr.bf16.mxu0 0
        %792 = vmatpush1.bf16.msra.mxu0 0
        %793 = vmatprep.subr.bf16.mxu0 0
        %794 = vmatpush1.bf16.msra.mxu0 0
        %795 = vmatprep.subr.bf16.mxu0 0
        %796 = vmatpush1.bf16.msra.mxu0 0
        %797 = vmatprep.subr.bf16.mxu0 0
        %798 = vmatpush1.bf16.msra.mxu0 0
        %799 = vmatprep.subr.bf16.mxu0 0
        %800 = vmatpush1.bf16.msra.mxu0 0
        %801 = vmatprep.subr.bf16.mxu0 0
        %802 = vmatpush1.bf16.msra.mxu0 0
        %803 = vmatprep.subr.bf16.mxu0 0
        %804 = vmatpush1.bf16.msra.mxu0 0
        %805 = vmatprep.subr.bf16.mxu0 0
        %806 = vmatpush1.bf16.msra.mxu0 0
        %807 = vmatprep.subr.bf16.mxu0 0
        %808 = vmatpush1.bf16.msra.mxu0 0
        %809 = vmatprep.subr.bf16.mxu0 0
        %810 = vmatpush1.bf16.msra.mxu0 0
        %811 = vmatprep.subr.bf16.mxu0 0
        %812 = vmatpush1.bf16.msra.mxu0 0
        %813 = vmatprep.subr.bf16.mxu0 0
        %814 = vmatpush1.bf16.msra.mxu0 0
        %815 = vmatprep.subr.bf16.mxu0 0
        %816 = vmatpush1.bf16.msra.mxu0 0
        %817 = vmatprep.subr.bf16.mxu0 0
        %818 = vmatpush1.bf16.msra.mxu0 0
        %819 = vmatprep.mubr.bf16.mxu0 0
        %820 = vmatmul.mubr.bf16.gmra.mrb[0].mxu0 %v782
        %v821 = vpop.f32.mrb[0].mxu0
        %v822 = vadd.f32 %v754, %v821
        %v823 = vpop.f32.mrb[0].mxu0
        %v824 = vadd.f32 %v754, %v823
        %v825 = vpop.f32.mrb[0].mxu0
        %v826 = vadd.f32 %v759, %v825
        %v827 = vpop.f32.mrb[0].mxu0
        %v828 = vadd.f32 %v759, %v827
        %829 = vmatprep.mubr.bf16.mxu0 0
        %830 = vmatmul.mubr.bf16.gmra.mrb[0].mxu0 %v785
        %v831 = vpop.f32.mrb[0].mxu0
        %v832 = vadd.f32 %v764, %v831
        %v833 = vpop.f32.mrb[0].mxu0
        %v834 = vadd.f32 %v764, %v833
        %v835 = vpop.f32.mrb[0].mxu0
        %v836 = vadd.f32 %v769, %v835
        %v837 = vpop.f32.mrb[0].mxu0
        %v838 = vadd.f32 %v769, %v837
        %839 = vdwg.mxu0
        %v840 = vld [vmem:[#allocation5] sm:$0xf]
        %v841 = vld [vmem:[#allocation5 + $0x4] sm:$0xf]
        %v842 = vld [vmem:[#allocation5 + $0x8] sm:$0xf]
        %v843 = vld [vmem:[#allocation5 + $0xc] sm:$0xf]
        %v844 = vld [vmem:[%s6] sm:$0x1]
        %v846 = vlaneseq
        %v847 = vshrl.u32 %v846, 7
        %v848 = vsub.s32 0, %v847
        %v849 = vrot.slane %v844, %v848
        %v855 = vunpack.c.l.b16 %v840
        %v856 = vunpack.c.l.b16 %v841
        %v857 = vunpack.c.l.b16 %v842
        %v858 = vunpack.c.l.b16 %v843
        %v859 = vpack.c.b16 %v856, %v855
        %v860 = vpack.c.b16 %v858, %v857
        %863 = vmatprep.subr.bf16.mxu0 0
        %864 = vmatpush1.bf16.msra.mxu0 %v859
        %865 = vmatprep.subr.bf16.mxu0 0
        %866 = vmatpush1.bf16.msra.mxu0 %v860
        %867 = vmatprep.subr.bf16.mxu0 0
        %868 = vmatpush1.bf16.msra.mxu0 0
        %869 = vmatprep.subr.bf16.mxu0 0
        %870 = vmatpush1.bf16.msra.mxu0 0
        %871 = vmatprep.subr.bf16.mxu0 0
        %872 = vmatpush1.bf16.msra.mxu0 0
        %873 = vmatprep.subr.bf16.mxu0 0
        %874 = vmatpush1.bf16.msra.mxu0 0
        %875 = vmatprep.subr.bf16.mxu0 0
        %876 = vmatpush1.bf16.msra.mxu0 0
        %877 = vmatprep.subr.bf16.mxu0 0
        %878 = vmatpush1.bf16.msra.mxu0 0
        %879 = vmatprep.subr.bf16.mxu0 0
        %880 = vmatpush1.bf16.msra.mxu0 0
        %881 = vmatprep.subr.bf16.mxu0 0
        %882 = vmatpush1.bf16.msra.mxu0 0
        %883 = vmatprep.subr.bf16.mxu0 0
        %884 = vmatpush1.bf16.msra.mxu0 0
        %885 = vmatprep.subr.bf16.mxu0 0
        %886 = vmatpush1.bf16.msra.mxu0 0
        %887 = vmatprep.subr.bf16.mxu0 0
        %888 = vmatpush1.bf16.msra.mxu0 0
        %889 = vmatprep.subr.bf16.mxu0 0
        %890 = vmatpush1.bf16.msra.mxu0 0
        %891 = vmatprep.subr.bf16.mxu0 0
        %892 = vmatpush1.bf16.msra.mxu0 0
        %893 = vmatprep.subr.bf16.mxu0 0
        %894 = vmatpush1.bf16.msra.mxu0 0
        %895 = vmatprep.mubr.bf16.mxu0 0
        %896 = vmatmul.mubr.bf16.gmra.mrb[0].mxu0 %v503
        %v897 = vpop.f32.mrb[0].mxu0
        %v898 = vadd.f32 %v849, %v897
        %v899 = vpop.f32.mrb[0].mxu0
        %v900 = vpop.f32.mrb[0].mxu0
        %v901 = vadd.f32 %v849, %v900
        %v902 = vpop.f32.mrb[0].mxu0
        %903 = vmatprep.mubr.bf16.mxu0 0
        %904 = vmatmul.mubr.bf16.gmra.mrb[0].mxu0 %v506
        %v905 = vpop.f32.mrb[0].mxu0
        %v906 = vadd.f32 %v849, %v905
        %v907 = vpop.f32.mrb[0].mxu0
        %v908 = vpop.f32.mrb[0].mxu0
        %v909 = vadd.f32 %v849, %v908
        %v910 = vpop.f32.mrb[0].mxu0
        %911 = vmatprep.mubr.bf16.mxu0 0
        %912 = vmatmul.mubr.bf16.gmra.mrb[0].mxu0 %v509
        %v913 = vpop.f32.mrb[0].mxu0
        %v914 = vadd.f32 %v849, %v913
        %v915 = vpop.f32.mrb[0].mxu0
        %v916 = vpop.f32.mrb[0].mxu0
        %v917 = vadd.f32 %v849, %v916
        %v918 = vpop.f32.mrb[0].mxu0
        %919 = vmatprep.mubr.bf16.mxu0 0
        %920 = vmatmul.mubr.bf16.gmra.mrb[0].mxu0 %v512
        %v921 = vpop.f32.mrb[0].mxu0
        %v922 = vadd.f32 %v849, %v921
        %v923 = vpop.f32.mrb[0].mxu0
        %v924 = vpop.f32.mrb[0].mxu0
        %v925 = vadd.f32 %v849, %v924
        %v926 = vpop.f32.mrb[0].mxu0
        %927 = vmatprep.mubr.bf16.mxu0 0
        %928 = vmatmul.mubr.bf16.gmra.mrb[0].mxu0 %v515
        %v929 = vpop.f32.mrb[0].mxu0
        %v930 = vadd.f32 %v849, %v929
        %v931 = vpop.f32.mrb[0].mxu0
        %v932 = vpop.f32.mrb[0].mxu0
        %v933 = vadd.f32 %v849, %v932
        %v934 = vpop.f32.mrb[0].mxu0
        %935 = vmatprep.mubr.bf16.mxu0 0
        %936 = vmatmul.mubr.bf16.gmra.mrb[0].mxu0 %v518
        %v937 = vpop.f32.mrb[0].mxu0
        %v938 = vadd.f32 %v849, %v937
        %v939 = vpop.f32.mrb[0].mxu0
        %v940 = vpop.f32.mrb[0].mxu0
        %v941 = vadd.f32 %v849, %v940
        %v942 = vpop.f32.mrb[0].mxu0
        %943 = vmatprep.mubr.bf16.mxu0 0
        %944 = vmatmul.mubr.bf16.gmra.mrb[0].mxu0 %v521
        %v945 = vpop.f32.mrb[0].mxu0
        %v946 = vadd.f32 %v849, %v945
        %v947 = vpop.f32.mrb[0].mxu0
        %v948 = vpop.f32.mrb[0].mxu0
        %v949 = vadd.f32 %v849, %v948
        %v950 = vpop.f32.mrb[0].mxu0
        %951 = vmatprep.mubr.bf16.mxu0 0
        %952 = vmatmul.mubr.bf16.gmra.mrb[0].mxu0 %v524
        %v953 = vpop.f32.mrb[0].mxu0
        %v954 = vadd.f32 %v849, %v953
        %v955 = vpop.f32.mrb[0].mxu0
        %v956 = vpop.f32.mrb[0].mxu0
        %v957 = vadd.f32 %v849, %v956
        %v958 = vpop.f32.mrb[0].mxu0
        %959 = vmatprep.mubr.bf16.mxu0 0
        %960 = vmatmul.mubr.bf16.gmra.mrb[0].mxu0 %v527
        %v961 = vpop.f32.mrb[0].mxu0
        %v962 = vadd.f32 %v849, %v961
        %v963 = vpop.f32.mrb[0].mxu0
        %v964 = vpop.f32.mrb[0].mxu0
        %v965 = vadd.f32 %v849, %v964
        %v966 = vpop.f32.mrb[0].mxu0
        %967 = vmatprep.mubr.bf16.mxu0 0
        %968 = vmatmul.mubr.bf16.gmra.mrb[0].mxu0 %v530
        %v969 = vpop.f32.mrb[0].mxu0
        %v970 = vadd.f32 %v849, %v969
        %v971 = vpop.f32.mrb[0].mxu0
        %v972 = vpop.f32.mrb[0].mxu0
        %v973 = vadd.f32 %v849, %v972
        %v974 = vpop.f32.mrb[0].mxu0
        %975 = vmatprep.mubr.bf16.mxu0 0
        %976 = vmatmul.mubr.bf16.gmra.mrb[0].mxu0 %v533
        %v977 = vpop.f32.mrb[0].mxu0
        %v978 = vadd.f32 %v849, %v977
        %v979 = vpop.f32.mrb[0].mxu0
        %v980 = vpop.f32.mrb[0].mxu0
        %v981 = vadd.f32 %v849, %v980
        %v982 = vpop.f32.mrb[0].mxu0
        %983 = vmatprep.mubr.bf16.mxu0 0
        %984 = vmatmul.mubr.bf16.gmra.mrb[0].mxu0 %v536
        %v985 = vpop.f32.mrb[0].mxu0
        %v986 = vadd.f32 %v849, %v985
        %v987 = vpop.f32.mrb[0].mxu0
        %v988 = vpop.f32.mrb[0].mxu0
        %v989 = vadd.f32 %v849, %v988
        %v990 = vpop.f32.mrb[0].mxu0
        %991 = vmatprep.mubr.bf16.mxu0 0
        %992 = vmatmul.mubr.bf16.gmra.mrb[0].mxu0 %v539
        %v993 = vpop.f32.mrb[0].mxu0
        %v994 = vadd.f32 %v849, %v993
        %v995 = vpop.f32.mrb[0].mxu0
        %v996 = vpop.f32.mrb[0].mxu0
        %v997 = vadd.f32 %v849, %v996
        %v998 = vpop.f32.mrb[0].mxu0
        %999 = vmatprep.mubr.bf16.mxu0 0
        %1000 = vmatmul.mubr.bf16.gmra.mrb[0].mxu0 %v542
        %v1001 = vpop.f32.mrb[0].mxu0
        %v1002 = vadd.f32 %v849, %v1001
        %v1003 = vpop.f32.mrb[0].mxu0
        %v1004 = vpop.f32.mrb[0].mxu0
        %v1005 = vadd.f32 %v849, %v1004
        %v1006 = vpop.f32.mrb[0].mxu0
        %1007 = vmatprep.mubr.bf16.mxu0 0
        %1008 = vmatmul.mubr.bf16.gmra.mrb[0].mxu0 %v545
        %v1009 = vpop.f32.mrb[0].mxu0
        %v1010 = vadd.f32 %v849, %v1009
        %v1011 = vpop.f32.mrb[0].mxu0
        %v1012 = vpop.f32.mrb[0].mxu0
        %v1013 = vadd.f32 %v849, %v1012
        %v1014 = vpop.f32.mrb[0].mxu0
        %1015 = vmatprep.mubr.bf16.mxu0 0
        %1016 = vmatmul.mubr.bf16.gmra.mrb[0].mxu0 %v548
        %v1017 = vpop.f32.mrb[0].mxu0
        %v1018 = vadd.f32 %v849, %v1017
        %v1019 = vpop.f32.mrb[0].mxu0
        %v1020 = vpop.f32.mrb[0].mxu0
        %v1021 = vadd.f32 %v849, %v1020
        %v1022 = vpop.f32.mrb[0].mxu0
        %1023 = vdwg.mxu0
        %v1024 = vpack.c.bf16 %v712, %v711
        %v1025 = vpack.c.bf16 %v714, %v713
        %v1026 = vpack.c.bf16 %v716, %v715
        %v1027 = vpack.c.bf16 %v718, %v717
        %v1028 = vpack.c.bf16 %v720, %v719
        %v1029 = vpack.c.bf16 %v722, %v721
        %v1030 = vpack.c.bf16 %v724, %v723
        %v1031 = vpack.c.bf16 %v726, %v725
        %v1032 = vpack.c.bf16 %v728, %v727
        %v1033 = vpack.c.bf16 %v730, %v729
        %v1034 = vpack.c.bf16 %v732, %v731
        %v1035 = vpack.c.bf16 %v734, %v733
        %v1036 = vpack.c.bf16 %v736, %v735
        %v1037 = vpack.c.bf16 %v738, %v737
        %v1038 = vpack.c.bf16 %v740, %v739
        %v1039 = vpack.c.bf16 %v742, %v741
        %v1056 = vunpack.c.l.b16 %v1024
        %v1057 = vunpack.c.h.b16 %v1024
        %v1058 = vunpack.c.l.b16 %v1025
        %v1059 = vunpack.c.h.b16 %v1025
        %v1060 = vunpack.c.l.b16 %v1026
        %v1061 = vunpack.c.h.b16 %v1026
        %v1062 = vunpack.c.l.b16 %v1027
        %v1063 = vunpack.c.h.b16 %v1027
        %v1064 = vunpack.c.l.b16 %v1028
        %v1065 = vunpack.c.h.b16 %v1028
        %v1066 = vunpack.c.l.b16 %v1029
        %v1067 = vunpack.c.h.b16 %v1029
        %v1068 = vunpack.c.l.b16 %v1030
        %v1069 = vunpack.c.h.b16 %v1030
        %v1070 = vunpack.c.l.b16 %v1031
        %v1071 = vunpack.c.h.b16 %v1031
        %v1072 = vunpack.c.l.b16 %v1032
        %v1073 = vunpack.c.h.b16 %v1032
        %v1074 = vunpack.c.l.b16 %v1033
        %v1075 = vunpack.c.h.b16 %v1033
        %v1076 = vunpack.c.l.b16 %v1034
        %v1077 = vunpack.c.h.b16 %v1034
        %v1078 = vunpack.c.l.b16 %v1035
        %v1079 = vunpack.c.h.b16 %v1035
        %v1080 = vunpack.c.l.b16 %v1036
        %v1081 = vunpack.c.h.b16 %v1036
        %v1082 = vunpack.c.l.b16 %v1037
        %v1083 = vunpack.c.h.b16 %v1037
        %v1084 = vunpack.c.l.b16 %v1038
        %v1085 = vunpack.c.h.b16 %v1038
        %v1086 = vunpack.c.l.b16 %v1039
        %v1087 = vunpack.c.h.b16 %v1039
        %v1088 = vpack.c.b16 %v1056, %v1056
        %v1089 = vpack.c.b16 %v1057, %v1057
        %v1090 = vpack.c.b16 %v1058, %v1058
        %v1091 = vpack.c.b16 %v1059, %v1059
        %v1092 = vpack.c.b16 %v1060, %v1060
        %v1093 = vpack.c.b16 %v1061, %v1061
        %v1094 = vpack.c.b16 %v1062, %v1062
        %v1095 = vpack.c.b16 %v1063, %v1063
        %v1096 = vpack.c.b16 %v1064, %v1064
        %v1097 = vpack.c.b16 %v1065, %v1065
        %v1098 = vpack.c.b16 %v1066, %v1066
        %v1099 = vpack.c.b16 %v1067, %v1067
        %v1100 = vpack.c.b16 %v1068, %v1068
        %v1101 = vpack.c.b16 %v1069, %v1069
        %v1102 = vpack.c.b16 %v1070, %v1070
        %v1103 = vpack.c.b16 %v1071, %v1071
        %v1104 = vpack.c.b16 %v1072, %v1072
        %v1105 = vpack.c.b16 %v1073, %v1073
        %v1106 = vpack.c.b16 %v1074, %v1074
        %v1107 = vpack.c.b16 %v1075, %v1075
        %v1108 = vpack.c.b16 %v1076, %v1076
        %v1109 = vpack.c.b16 %v1077, %v1077
        %v1110 = vpack.c.b16 %v1078, %v1078
        %v1111 = vpack.c.b16 %v1079, %v1079
        %v1112 = vpack.c.b16 %v1080, %v1080
        %v1113 = vpack.c.b16 %v1081, %v1081
        %v1114 = vpack.c.b16 %v1082, %v1082
        %v1115 = vpack.c.b16 %v1083, %v1083
        %v1116 = vpack.c.b16 %v1084, %v1084
        %v1117 = vpack.c.b16 %v1085, %v1085
        %v1118 = vpack.c.b16 %v1086, %v1086
        %v1119 = vpack.c.b16 %v1087, %v1087
        %vm1152 = vcmask 257024
        %1153 = vst.msk [vmem:[%s420] sm:$0xf] %vm1152, %v1088
        %1154 = vst.msk [vmem:[%s420 + $0x4] sm:$0xf] %vm1152, %v1089
        %1155 = vst.msk [vmem:[%s420 + $0x8] sm:$0xf] %vm1152, %v1090
        %1156 = vst.msk [vmem:[%s420 + $0xc] sm:$0xf] %vm1152, %v1091
        %1157 = vst.msk [vmem:[%s420 + $0x10] sm:$0xf] %vm1152, %v1092
        %1158 = vst.msk [vmem:[%s420 + $0x14] sm:$0xf] %vm1152, %v1093
        %1159 = vst.msk [vmem:[%s420 + $0x18] sm:$0xf] %vm1152, %v1094
        %1160 = vst.msk [vmem:[%s420 + $0x1c] sm:$0xf] %vm1152, %v1095
        %1161 = vst.msk [vmem:[%s420 + $0x20] sm:$0xf] %vm1152, %v1096
        %1162 = vst.msk [vmem:[%s420 + $0x24] sm:$0xf] %vm1152, %v1097
        %1163 = vst.msk [vmem:[%s420 + $0x28] sm:$0xf] %vm1152, %v1098
        %1164 = vst.msk [vmem:[%s420 + $0x2c] sm:$0xf] %vm1152, %v1099
        %1165 = vst.msk [vmem:[%s420 + $0x30] sm:$0xf] %vm1152, %v1100
        %1166 = vst.msk [vmem:[%s420 + $0x34] sm:$0xf] %vm1152, %v1101
        %1167 = vst.msk [vmem:[%s420 + $0x38] sm:$0xf] %vm1152, %v1102
        %1168 = vst.msk [vmem:[%s420 + $0x3c] sm:$0xf] %vm1152, %v1103
        %1169 = vst.msk [vmem:[%s420 + $0x40] sm:$0xf] %vm1152, %v1104
        %1170 = vst.msk [vmem:[%s420 + $0x44] sm:$0xf] %vm1152, %v1105
        %1171 = vst.msk [vmem:[%s420 + $0x48] sm:$0xf] %vm1152, %v1106
        %1172 = vst.msk [vmem:[%s420 + $0x4c] sm:$0xf] %vm1152, %v1107
        %1173 = vst.msk [vmem:[%s420 + $0x50] sm:$0xf] %vm1152, %v1108
        %1174 = vst.msk [vmem:[%s420 + $0x54] sm:$0xf] %vm1152, %v1109
        %1175 = vst.msk [vmem:[%s420 + $0x58] sm:$0xf] %vm1152, %v1110
        %1176 = vst.msk [vmem:[%s420 + $0x5c] sm:$0xf] %vm1152, %v1111
        %1177 = vst.msk [vmem:[%s420 + $0x60] sm:$0xf] %vm1152, %v1112
        %1178 = vst.msk [vmem:[%s420 + $0x64] sm:$0xf] %vm1152, %v1113
        %1179 = vst.msk [vmem:[%s420 + $0x68] sm:$0xf] %vm1152, %v1114
        %1180 = vst.msk [vmem:[%s420 + $0x6c] sm:$0xf] %vm1152, %v1115
        %1181 = vst.msk [vmem:[%s420 + $0x70] sm:$0xf] %vm1152, %v1116
        %1182 = vst.msk [vmem:[%s420 + $0x74] sm:$0xf] %vm1152, %v1117
        %1183 = vst.msk [vmem:[%s420 + $0x78] sm:$0xf] %vm1152, %v1118
        %1184 = vst.msk [vmem:[%s420 + $0x7c] sm:$0xf] %vm1152, %v1119
        %v1185 = vpack.c.bf16 %v826, %v822
        %v1186 = vpack.c.bf16 %v828, %v824
        %v1187 = vpack.c.bf16 %v836, %v832
        %v1188 = vpack.c.bf16 %v838, %v834
        %v1193 = vunpack.c.l.b16 %v1185
        %v1194 = vunpack.c.l.b16 %v1186
        %v1195 = vunpack.c.h.b16 %v1185
        %v1196 = vunpack.c.h.b16 %v1186
        %v1197 = vunpack.c.l.b16 %v1187
        %v1198 = vunpack.c.l.b16 %v1188
        %v1199 = vunpack.c.h.b16 %v1187
        %v1200 = vunpack.c.h.b16 %v1188
        %v1201 = vpack.c.b16 %v1194, %v1193
        %v1202 = vpack.c.b16 %v1196, %v1195
        %v1203 = vpack.c.b16 %v1198, %v1197
        %v1204 = vpack.c.b16 %v1200, %v1199
        %1209 = vst [vmem:[%s399] sm:$0xff] %v1201
        %1210 = vst [vmem:[%s399 + $0x8] sm:$0xff] %v1202
        %1211 = vst [vmem:[%s399 + $0x10] sm:$0xff] %v1203
        %1212 = vst [vmem:[%s399 + $0x18] sm:$0xff] %v1204
        %v1213 = vpack.c.bf16 %v901, %v898
        %v1214 = vpack.c.bf16 %v909, %v906
        %v1215 = vpack.c.bf16 %v917, %v914
        %v1216 = vpack.c.bf16 %v925, %v922
        %v1217 = vpack.c.bf16 %v933, %v930
        %v1218 = vpack.c.bf16 %v941, %v938
        %v1219 = vpack.c.bf16 %v949, %v946
        %v1220 = vpack.c.bf16 %v957, %v954
        %v1221 = vpack.c.bf16 %v965, %v962
        %v1222 = vpack.c.bf16 %v973, %v970
        %v1223 = vpack.c.bf16 %v981, %v978
        %v1224 = vpack.c.bf16 %v989, %v986
        %v1225 = vpack.c.bf16 %v997, %v994
        %v1226 = vpack.c.bf16 %v1005, %v1002
        %v1227 = vpack.c.bf16 %v1013, %v1010
        %v1228 = vpack.c.bf16 %v1021, %v1018
        %v1245 = vunpack.c.l.b16 %v1213
        %v1246 = vunpack.c.h.b16 %v1213
        %v1247 = vunpack.c.l.b16 %v1214
        %v1248 = vunpack.c.h.b16 %v1214
        %v1249 = vunpack.c.l.b16 %v1215
        %v1250 = vunpack.c.h.b16 %v1215
        %v1251 = vunpack.c.l.b16 %v1216
        %v1252 = vunpack.c.h.b16 %v1216
        %v1253 = vunpack.c.l.b16 %v1217
        %v1254 = vunpack.c.h.b16 %v1217
        %v1255 = vunpack.c.l.b16 %v1218
        %v1256 = vunpack.c.h.b16 %v1218
        %v1257 = vunpack.c.l.b16 %v1219
        %v1258 = vunpack.c.h.b16 %v1219
        %v1259 = vunpack.c.l.b16 %v1220
        %v1260 = vunpack.c.h.b16 %v1220
        %v1261 = vunpack.c.l.b16 %v1221
        %v1262 = vunpack.c.h.b16 %v1221
        %v1263 = vunpack.c.l.b16 %v1222
        %v1264 = vunpack.c.h.b16 %v1222
        %v1265 = vunpack.c.l.b16 %v1223
        %v1266 = vunpack.c.h.b16 %v1223
        %v1267 = vunpack.c.l.b16 %v1224
        %v1268 = vunpack.c.h.b16 %v1224
        %v1269 = vunpack.c.l.b16 %v1225
        %v1270 = vunpack.c.h.b16 %v1225
        %v1271 = vunpack.c.l.b16 %v1226
        %v1272 = vunpack.c.h.b16 %v1226
        %v1273 = vunpack.c.l.b16 %v1227
        %v1274 = vunpack.c.h.b16 %v1227
        %v1275 = vunpack.c.l.b16 %v1228
        %v1276 = vunpack.c.h.b16 %v1228
        %v1277 = vpack.c.b16 %v1245, %v1245
        %v1278 = vpack.c.b16 %v1246, %v1246
        %v1279 = vpack.c.b16 %v1247, %v1247
        %v1280 = vpack.c.b16 %v1248, %v1248
        %v1281 = vpack.c.b16 %v1249, %v1249
        %v1282 = vpack.c.b16 %v1250, %v1250
        %v1283 = vpack.c.b16 %v1251, %v1251
        %v1284 = vpack.c.b16 %v1252, %v1252
        %v1285 = vpack.c.b16 %v1253, %v1253
        %v1286 = vpack.c.b16 %v1254, %v1254
        %v1287 = vpack.c.b16 %v1255, %v1255
        %v1288 = vpack.c.b16 %v1256, %v1256
        %v1289 = vpack.c.b16 %v1257, %v1257
        %v1290 = vpack.c.b16 %v1258, %v1258
        %v1291 = vpack.c.b16 %v1259, %v1259
        %v1292 = vpack.c.b16 %v1260, %v1260
        %v1293 = vpack.c.b16 %v1261, %v1261
        %v1294 = vpack.c.b16 %v1262, %v1262
        %v1295 = vpack.c.b16 %v1263, %v1263
        %v1296 = vpack.c.b16 %v1264, %v1264
        %v1297 = vpack.c.b16 %v1265, %v1265
        %v1298 = vpack.c.b16 %v1266, %v1266
        %v1299 = vpack.c.b16 %v1267, %v1267
        %v1300 = vpack.c.b16 %v1268, %v1268
        %v1301 = vpack.c.b16 %v1269, %v1269
        %v1302 = vpack.c.b16 %v1270, %v1270
        %v1303 = vpack.c.b16 %v1271, %v1271
        %v1304 = vpack.c.b16 %v1272, %v1272
        %v1305 = vpack.c.b16 %v1273, %v1273
        %v1306 = vpack.c.b16 %v1274, %v1274
        %v1307 = vpack.c.b16 %v1275, %v1275
        %v1308 = vpack.c.b16 %v1276, %v1276
        %1341 = vst.msk [vmem:[%s431] sm:$0xf] %vm1152, %v1277
        %1342 = vst.msk [vmem:[%s431 + $0x4] sm:$0xf] %vm1152, %v1278
        %1343 = vst.msk [vmem:[%s431 + $0x8] sm:$0xf] %vm1152, %v1279
        %1344 = vst.msk [vmem:[%s431 + $0xc] sm:$0xf] %vm1152, %v1280
        %1345 = vst.msk [vmem:[%s431 + $0x10] sm:$0xf] %vm1152, %v1281
        %1346 = vst.msk [vmem:[%s431 + $0x14] sm:$0xf] %vm1152, %v1282
        %1347 = vst.msk [vmem:[%s431 + $0x18] sm:$0xf] %vm1152, %v1283
        %1348 = vst.msk [vmem:[%s431 + $0x1c] sm:$0xf] %vm1152, %v1284
        %1349 = vst.msk [vmem:[%s431 + $0x20] sm:$0xf] %vm1152, %v1285
        %1350 = vst.msk [vmem:[%s431 + $0x24] sm:$0xf] %vm1152, %v1286
        %1351 = vst.msk [vmem:[%s431 + $0x28] sm:$0xf] %vm1152, %v1287
        %1352 = vst.msk [vmem:[%s431 + $0x2c] sm:$0xf] %vm1152, %v1288
        %1353 = vst.msk [vmem:[%s431 + $0x30] sm:$0xf] %vm1152, %v1289
        %1354 = vst.msk [vmem:[%s431 + $0x34] sm:$0xf] %vm1152, %v1290
        %1355 = vst.msk [vmem:[%s431 + $0x38] sm:$0xf] %vm1152, %v1291
        %1356 = vst.msk [vmem:[%s431 + $0x3c] sm:$0xf] %vm1152, %v1292
        %1357 = vst.msk [vmem:[%s431 + $0x40] sm:$0xf] %vm1152, %v1293
        %1358 = vst.msk [vmem:[%s431 + $0x44] sm:$0xf] %vm1152, %v1294
        %1359 = vst.msk [vmem:[%s431 + $0x48] sm:$0xf] %vm1152, %v1295
        %1360 = vst.msk [vmem:[%s431 + $0x4c] sm:$0xf] %vm1152, %v1296
        %1361 = vst.msk [vmem:[%s431 + $0x50] sm:$0xf] %vm1152, %v1297
        %1362 = vst.msk [vmem:[%s431 + $0x54] sm:$0xf] %vm1152, %v1298
        %1363 = vst.msk [vmem:[%s431 + $0x58] sm:$0xf] %vm1152, %v1299
        %1364 = vst.msk [vmem:[%s431 + $0x5c] sm:$0xf] %vm1152, %v1300
        %1365 = vst.msk [vmem:[%s431 + $0x60] sm:$0xf] %vm1152, %v1301
        %1366 = vst.msk [vmem:[%s431 + $0x64] sm:$0xf] %vm1152, %v1302
        %1367 = vst.msk [vmem:[%s431 + $0x68] sm:$0xf] %vm1152, %v1303
        %1368 = vst.msk [vmem:[%s431 + $0x6c] sm:$0xf] %vm1152, %v1304
        %1369 = vst.msk [vmem:[%s431 + $0x70] sm:$0xf] %vm1152, %v1305
        %1370 = vst.msk [vmem:[%s431 + $0x74] sm:$0xf] %vm1152, %v1306
        %1371 = vst.msk [vmem:[%s431 + $0x78] sm:$0xf] %vm1152, %v1307
        %1372 = vst.msk [vmem:[%s431 + $0x7c] sm:$0xf] %vm1152, %v1308
        %s1373 = smul.u32 32, %s33
        %p1374 = scmp.lt.s32.totalorder %s32, 1
        %s1375 = scalar_select %p1374, %s32, 1
        %p1376 = scmp.lt.s32.totalorder %s1373, 31
        %s1377 = scalar_select %p1376, %s1373, 31
        %s1378 = smul.addr %s1375, 32
        %s1379 = sadd.s32 %s1377, %s1378
        %s1380 = smul.addr %s1379, 4
        %s1381 = scalar_lea.vmem %s7, %s1380
        %s1382 = sand.u32 %s232, 1
        %s1383 = scalar_lea.sflag [#allocation4], %s1382
        %s1384 = sand.u32 %s232, 1
        %s1385 = smul.addr %s1384, 32
        %s1386 = scalar_lea.vmem [#allocation7], %s1385
        %s1387 = smul.u32 32, %s33
        %p1388 = scmp.lt.s32.totalorder %s32, 1
        %s1389 = scalar_select %p1388, %s32, 1
        %p1390 = scmp.lt.s32.totalorder %s1387, 31
        %s1391 = scalar_select %p1390, %s1387, 31
        %s1392 = smul.addr %s1389, 32
        %s1393 = sadd.s32 %s1391, %s1392
        %s1394 = smul.addr %s1393, 4
        %s1395 = scalar_lea.vmem %s9, %s1394
        // Predicated region
        $region57: #{tpu_custom_call.1} parent=47 // pred_check
          %p1396 = pneg %p214
        $region58: #{tpu_custom_call.1} parent=47 // pred_check_branch
          %1398 = sbr.rel (%p1396) target = $region60
        $region59: #{tpu_custom_call.1} parent=47 // pred_region
          %s1399 = smul.u32 32, %s33
        $region60: #{tpu_custom_call.1} parent=47 // pred_fallthru
          _
        // Predicated region
        $region61: #{tpu_custom_call.1} parent=47 // pred_check
          %p1400 = pneg %p242
        $region62: #{tpu_custom_call.1} parent=47 // pred_check_branch
          %1402 = sbr.rel (%p1400) target = $region64
        $region63: #{tpu_custom_call.1} parent=47 // pred_region
          %s1403 = smul.u32 2, %s33
          %s1405 = ssub.s32 512, 512
          %1406 = vsyncadd %s1383, %s1405
          %s1407 = smul.addr %s32, 8
          %s1408 = sadd.s32 %s1403, %s1407
          %s1409 = smul.addr %s1408, 64
          %s1410 = scalar_lea.hbm %s8, %s1409
          %s1411 = sshll.u32 %s1386, 4
          %s1412 = int_to_ptr.vmem [resolvable:$true] %s1411
          %1417 = dma.vmem_to_hbm [thread:$0]  %s1412, 512, %s1410, %s1383, 128, 128, 8
        $region64: #{tpu_custom_call.1} parent=47 // pred_fallthru
          _
        // Predicated region
        $region65: #{tpu_custom_call.1} parent=47 // pred_check
          %p1418 = pneg %p270
        $region66: #{tpu_custom_call.1} parent=47 // pred_check_branch
          %1420 = sbr.rel (%p1418) target = $region68
        $region67: #{tpu_custom_call.1} parent=47 // pred_region
          %s1421 = smul.u32 32, %s33
        $region68: #{tpu_custom_call.1} parent=47 // pred_fallthru
          _
      $region48: #{tpu_custom_call.1} parent=5 // pred_fallthru
        _
      %p1422 = scmp.le.s32.totalorder 2, %s23
      // Predicated region
      $region69: #{tpu_custom_call.1} parent=5 // pred_check
        %p1423 = pneg %p1422
      $region70: #{tpu_custom_call.1} parent=5 // pred_check_branch
        %1425 = sbr.rel (%p1423) target = $region72
      $region71: #{tpu_custom_call.1} parent=5 // pred_region
        %s1426 = ssub.s32 %s23, 2
        // Predicated region
        $region73: #{tpu_custom_call.1} parent=71 // pred_check
          %p1427 = pneg %p220
        $region74: #{tpu_custom_call.1} parent=71 // pred_check_branch
          %1429 = sbr.rel (%p1427) target = $region76
        $region75: #{tpu_custom_call.1} parent=71 // pred_region
          %s1430 = smul.u32 32, %s35
          %p1431 = scmp.lt.s32.totalorder %s34, 1
          %s1432 = scalar_select %p1431, %s34, 1
          %p1433 = scmp.lt.s32.totalorder %s1430, 31
          %s1434 = scalar_select %p1433, %s1430, 31
          %s1435 = smul.addr %s1432, 32
          %s1436 = sadd.s32 %s1434, %s1435
          %s1437 = smul.addr %s1436, 4
          %s1438 = scalar_lea.vmem %s7, %s1437
        $region76: #{tpu_custom_call.1} parent=71 // pred_fallthru
          _
        // Predicated region
        $region77: #{tpu_custom_call.1} parent=71 // pred_check
          %p1439 = pneg %p248
        $region78: #{tpu_custom_call.1} parent=71 // pred_check_branch
          %1441 = sbr.rel (%p1439) target = $region80
        $region79: #{tpu_custom_call.1} parent=71 // pred_region
          %s1442 = sand.u32 %s233, 1
          %s1443 = scalar_lea.sflag [#allocation4], %s1442
          %s1444 = sand.u32 %s233, 1
          %s1445 = smul.addr %s1444, 32
          %s1446 = scalar_lea.vmem [#allocation7], %s1445
          %1447 = dma.done %s1443, 512
        $region80: #{tpu_custom_call.1} parent=71 // pred_fallthru
          _
        // Predicated region
        $region81: #{tpu_custom_call.1} parent=71 // pred_check
          %p1448 = pneg %p276
        $region82: #{tpu_custom_call.1} parent=71 // pred_check_branch
          %1450 = sbr.rel (%p1448) target = $region84
        $region83: #{tpu_custom_call.1} parent=71 // pred_region
          %s1451 = smul.u32 32, %s35
          %p1452 = scmp.lt.s32.totalorder %s34, 1
          %s1453 = scalar_select %p1452, %s34, 1
          %p1454 = scmp.lt.s32.totalorder %s1451, 31
          %s1455 = scalar_select %p1454, %s1451, 31
          %s1456 = smul.addr %s1453, 32
          %s1457 = sadd.s32 %s1455, %s1456
          %s1458 = smul.addr %s1457, 4
          %s1459 = scalar_lea.vmem %s9, %s1458
        $region84: #{tpu_custom_call.1} parent=71 // pred_fallthru
          _
      $region72: #{tpu_custom_call.1} parent=5 // pred_fallthru
        _
    $region6: #{tpu_custom_call.1} parent=1 // loop_footer
      %s27 = sadd.s32 1, %s23
    $region7: #{tpu_custom_call.1} parent=1 // loop_footer_branch
      %22 = sbr.rel target = $region3
    $region8: #{tpu_custom_call.1} parent=1 // loop_exit
      _
    %1460 = vsyncpa [#allocation3], 1
    %s1461 = scalar_lea.sflag [#allocation3], 1
    %1462 = vsyncpa %s1461, 1
    %1463 = vsyncpa [#allocation6], 1
    %1464 = vsyncpa [#allocation4], 1
    %s1465 = scalar_lea.sflag [#allocation4], 1
    %1466 = vsyncpa %s1465, 1

</llo_original>
